<compile_context>
chip_gen: v7x
topology: tpu7x:2x2x1
jax: 0.10.0
libtpu: 0.0.40
codegen_flags: <defaults>
</compile_context>

<pallas_src>
import functools

import jax
import jax.numpy as jnp
from jax import lax
from jax.experimental import pallas as pl
from jax.experimental.pallas import tpu as pltpu

EPS = 1e-5  # nn.LayerNorm default


def _layernorm(x, w, b):
    mean = jnp.mean(x, axis=-1, keepdims=True)
    var = jnp.mean(jnp.square(x - mean), axis=-1, keepdims=True)
    return (x - mean) * lax.rsqrt(var + EPS) * w + b


def _round_up(v, m):
    return -(-v // m) * m


def attn_pooler_kernel(
    x_ref,      # (Nb, L_p, C)      bf16  batch block for ln_k (zero-padded rows)
    qh_ref,     # (n_head*nq, hd_p) bf16  LN'd, projected, scaled, head-stacked queries
    lnk_w_ref,  # (1, C)  f32
    lnk_b_ref,  # (1, C)  f32
    kvw_t_ref,  # (C, 2*D_p) bf16   fused [k_proj.T | v_proj.T], per-head groups padded
    bkv_ref,    # (1, 2*D_p) f32    fused [b_k | b_v] (padded lanes are zero)
    ow_t_ref,   # (D_p, D) bf16     out_proj.weight.T with per-head row padding
    ob_ref,     # (1, D)  f32
    out_ref,    # (Nb, nq, D) f32
    s_scr,      # VMEM (n_head*nq, L_p) f32   score slab, all heads stacked on rows
    ctx_scr,    # VMEM (nq, D_p) f32          head-concat attention context, lane-aligned
    *,
    n_head: int,
    nq: int,
    hd_p: int,
    L: int,
    L_p: int,
    Nb: int,
    approx_recip: bool,
):
    D_p = n_head * hd_p
    C = x_ref.shape[-1]

    # ---- ln_k on the whole (Nb*L_p, C) slab, f32 math ---------------------
    x = x_ref[...].reshape(Nb * L_p, C).astype(jnp.float32)
    xn = _layernorm(x, lnk_w_ref[...], lnk_b_ref[...])

    # ---- Fused K|V projection: ONE big bf16 GEMM, f32 accumulation --------
    # Cast to bf16 immediately after the bias add so the f32 (Nb*L_p, 2*D_p)
    # temp dies right away (v5e: single vector-store slot / VMEM pressure).
    kvb = (jnp.dot(xn.astype(jnp.bfloat16), kvw_t_ref[...],
                   preferred_element_type=jnp.float32)
           + bkv_ref[...]).astype(jnp.bfloat16)                  # (Nb*L_p, 2*D_p)

    qh_all = qh_ref[...]                                         # (n_head*nq, hd_p)
    contract_last = (((1,), (1,)), ((), ()))                     # a @ b.T without transpose

    # Key-padding mask for zero-padded sequence rows (L -> L_p).
    if L < L_p:
        lane = lax.broadcasted_iota(jnp.int32, (1, L_p), 1)
        neg = jnp.where(lane < L, 0.0, -1e30).astype(jnp.float32)

    for b in range(Nb):
        kvb_b = kvb[b * L_p:(b + 1) * L_p, :]                    # (L_p, 2*D_p)

        # ---- scores for all heads, written at static row offsets ----------
        # (nq should ideally be a multiple of 8 to keep these writes sublane-aligned)
        for h in range(n_head):
            qh = qh_all[h * nq:(h + 1) * nq, :]                  # (nq, hd_p), pre-scaled
            kh = kvb_b[:, h * hd_p:(h + 1) * hd_p]               # (L_p, hd_p)
            s_scr[h * nq:(h + 1) * nq, :] = lax.dot_general(
                qh, kh, contract_last, preferred_element_type=jnp.float32)

        # ---- ONE vectorized softmax over all heads -------------------------
        s = s_scr[...]
        if L < L_p:
            s = s + neg
        m = jnp.max(s, axis=-1, keepdims=True)
        e = jnp.exp(s - m)
        denom = jnp.sum(e, axis=-1, keepdims=True)
        if approx_recip:
            # EUP reciprocal: ~2^-12 relative error — deliberate, documented deviation.
            p = (e * pl.reciprocal(denom, approx=True)).astype(jnp.bfloat16)
        else:
            p = (e / denom).astype(jnp.bfloat16)

        # ---- ctx_h = p_h @ V_h, written at static lane offsets -------------
        for h in range(n_head):
            ph = p[h * nq:(h + 1) * nq, :]                       # (nq, L_p)
            vh = kvb_b[:, D_p + h * hd_p:D_p + (h + 1) * hd_p]   # (L_p, hd_p)
            ctx_scr[:, h * hd_p:(h + 1) * hd_p] = jnp.dot(
                ph, vh, preferred_element_type=jnp.float32)

        # ---- ONE full-contraction output projection (K = D_p) --------------
        out = jnp.dot(ctx_scr[...].astype(jnp.bfloat16), ow_t_ref[...],
                      preferred_element_type=jnp.float32) + ob_ref[...]
        out_ref[b] = out.astype(out_ref.dtype)


def _pick_batch_block(N, L_p):
    """Batch elements per grid step: amortize the ~0.35us step overhead for short
    sequences, while keeping >= 2 grid steps when possible (v7x has 2 TensorCores)."""
    best = 1
    for nb in range(2, N + 1):
        if N % nb:
            continue
        if nb * L_p > 1024:            # keep the fused KV-GEMM M / VMEM bounded
            continue
        if N // nb < 2 and N > 1:      # don't idle the second v7x TensorCore
            continue
        best = nb
    return best


def _buf_bytes(shape, itemsize, nbuf):
    """VMEM bytes for `nbuf` buffers of `shape`, rounding trailing dims to (8,128)."""
    r = shape[-2] if len(shape) >= 2 else 1
    c = shape[-1]
    lead = 1
    for s in shape[:-2]:
        lead *= s
    return lead * _round_up(r, 8) * _round_up(c, 128) * itemsize * nbuf


@functools.partial(jax.jit, static_argnames=("n_head", "approx_recip"))
def attentional_pooler(x, params, n_head, approx_recip=True):
    """x: (N, L, C) -> (N, n_queries, d_model) float32."""
    N, L, C = x.shape
    nq, D = params["query"].shape
    assert D % n_head == 0
    hd = D // n_head
    hd_p = _round_up(hd, 128)          # lane-align per-head slices (zero-pad, exact)
    D_p = n_head * hd_p
    L_p = _round_up(L, 128)            # lane-dense score slab; padded keys masked
    f32 = jnp.float32

    # ---- Batch-invariant query path, hoisted out of the kernel (jitted so it
    #      fuses with the pallas_call instead of eager per-call dispatches) ----
    qn = _layernorm(params["query"].astype(f32),
                    params["lnq_w"].astype(f32), params["lnq_b"].astype(f32))
    bq = params["in_proj_b"][0 * D:1 * D].astype(f32)
    Q = (qn @ params["q_proj_w"].T.astype(f32) + bq) * (hd ** -0.5)      # (nq, D)
    Qh = jnp.pad(Q.reshape(nq, n_head, hd), ((0, 0), (0, 0), (0, hd_p - hd)))
    qh_rows = Qh.transpose(1, 0, 2).reshape(n_head * nq, hd_p).astype(jnp.bfloat16)

    # ---- Fused / head-padded / bf16 weights ---------------------------------
    def pad_proj_t(w):                 # (D, C) -> (C, D_p), per-head column groups padded
        wt = w.astype(f32).T.reshape(C, n_head, hd)
        return jnp.pad(wt, ((0, 0), (0, 0), (0, hd_p - hd))).reshape(C, D_p)

    def pad_bias(bvec):                # (D,) -> (D_p,), zero in padded lanes
        bb = bvec.astype(f32).reshape(n_head, hd)
        return jnp.pad(bb, ((0, 0), (0, hd_p - hd))).reshape(D_p)

    kvw_t = jnp.concatenate([pad_proj_t(params["k_proj_w"]),
                             pad_proj_t(params["v_proj_w"])],
                            axis=1).astype(jnp.bfloat16)                  # (C, 2*D_p)
    bkv = jnp.concatenate([pad_bias(params["in_proj_b"][1 * D:2 * D]),
                           pad_bias(params["in_proj_b"][2 * D:3 * D])]
                          ).reshape(1, 2 * D_p).astype(f32)
    ow_t = jnp.pad(params["out_proj_w"].astype(f32).T.reshape(n_head, hd, D),
                   ((0, 0), (0, hd_p - hd), (0, 0))
                   ).reshape(D_p, D).astype(jnp.bfloat16)                 # (D_p, D)
    ob = params["out_proj_b"].reshape(1, D).astype(f32)
    lnk_w = params["lnk_w"].reshape(1, C).astype(f32)
    lnk_b = params["lnk_b"].reshape(1, C).astype(f32)

    # ---- x: bf16 + zero-pad L (halves the only grid-varying HBM DMA) --------
    xb = x.astype(jnp.bfloat16)
    if L_p != L:
        xb = jnp.pad(xb, ((0, 0), (0, L_p - L), (0, 0)))

    Nb = _pick_batch_block(N, L_p)

    # Grid-invariant inputs: block index never changes -> single-buffer them.
    def const_spec(shape):
        return pl.BlockSpec(shape, lambda b: (0,) * len(shape),
                            pipeline_mode=pl.Buffered(1))

    kernel = functools.partial(attn_pooler_kernel, n_head=n_head, nq=nq,
                               hd_p=hd_p, L=L, L_p=L_p, Nb=Nb,
                               approx_recip=approx_recip)

    # ---- VMEM budget: real bytes per buffer, generation-aware cap -----------
    est = (
        _buf_bytes((Nb, L_p, C), 2, 2)                 # x block (bf16, double-buffered)
        + _buf_bytes((Nb, nq, D), 4, 2)                # out block (f32, double-buffered)
        + _buf_bytes((n_head * nq, hd_p), 2, 1)        # qh (single-buffered)
        + _buf_bytes((C, 2 * D_p), 2, 1)               # kvw_t
        + _buf_bytes((D_p, D), 2, 1)                   # ow_t
        + _buf_bytes((1, 2 * D_p), 4, 1)               # bkv
        + _buf_bytes((1, D), 4, 1)                     # ob
        + 2 * _buf_bytes((1, C), 4, 1)                 # ln_k w / b
        + _buf_bytes((n_head * nq, L_p), 4, 1)         # scores scratch
        + _buf_bytes((nq, D_p), 4, 1)                  # ctx scratch
        # live value slabs: x/xn f32, kvb bf16 (+ transient f32), exp/p slabs
        + Nb * L_p * C * 8
        + Nb * L_p * 2 * D_p * 6
        + n_head * nq * L_p * 10
        + (1 << 20)
    )
    try:
        phys_vmem = pltpu.get_tpu_info().vmem_capacity_bytes
    except Exception:                                  # conservative fallback (v7x per-TC)
        phys_vmem = 64 * 1024 * 1024
    cap = int(phys_vmem * 0.85)                        # headroom for Mosaic-internal scratch
    vmem_limit = int(min(cap, max(32 * 1024 * 1024, 2 * est)))

    # TODO(synk): for very long L / large C on v7x (64 MiB VMEM), add an 'arbitrary'
    # L-chunk grid axis with online-softmax (flash-style) accumulation.
    return pl.pallas_call(
        kernel,
        out_shape=jax.ShapeDtypeStruct((N, nq, D), jnp.float32),
        grid_spec=pltpu.PrefetchScalarGridSpec(
            num_scalar_prefetch=0,
            grid=(N // Nb,),
            in_specs=[
                pl.BlockSpec((Nb, L_p, C), lambda b: (b, 0, 0)),     # per-step batch slab
                const_spec((n_head * nq, hd_p)),                     # precomputed queries
                const_spec((1, C)), const_spec((1, C)),              # ln_k w / b
                const_spec((C, 2 * D_p)), const_spec((1, 2 * D_p)),  # fused KV weight / bias
                const_spec((D_p, D)), const_spec((1, D)),            # out proj (T) / bias
            ],
            out_specs=pl.BlockSpec((Nb, nq, D), lambda b: (b, 0, 0)),
            scratch_shapes=[pltpu.VMEM((n_head * nq, L_p), jnp.float32),
                            pltpu.VMEM((nq, D_p), jnp.float32)],
        ),
        compiler_params=pltpu.CompilerParams(
            dimension_semantics=("parallel",),
            vmem_limit_bytes=vmem_limit,
        ),
    )(xb, qh_rows, lnk_w, lnk_b, kvw_t, bkv, ow_t, ob)


# ---------------------------------------------------------------------------
# Pure-JAX f32 reference of the PyTorch forward (verification only).
# ---------------------------------------------------------------------------
def reference(x, params, n_head):
    N, L, C = x.shape
    nq, D = params["query"].shape
    hd = D // n_head

    xn = _layernorm(x, params["lnk_w"], params["lnk_b"])                  # (N, L, C)
    qn = _layernorm(params["query"], params["lnq_w"], params["lnq_b"])    # (nq, D)

    bq = params["in_proj_b"][0 * D:1 * D]
    bk = params["in_proj_b"][1 * D:2 * D]
    bv = params["in_proj_b"][2 * D:3 * D]

    Q = qn @ params["q_proj_w"].T + bq                                    # (nq, D)
    K = jnp.einsum("nlc,dc->nld", xn, params["k_proj_w"]) + bk            # (N, L, D)
    V = jnp.einsum("nlc,dc->nld", xn, params["v_proj_w"]) + bv

    Qh = Q.reshape(nq, n_head, hd)
    Kh = K.reshape(N, L, n_head, hd)
    Vh = V.reshape(N, L, n_head, hd)

    s = jnp.einsum("qhd,nlhd->nhql", Qh, Kh) / jnp.sqrt(hd)
    a = jax.nn.softmax(s, axis=-1)
    ctx = jnp.einsum("nhql,nlhd->nqhd", a, Vh).reshape(N, nq, D)
    return ctx @ params["out_proj_w"].T + params["out_proj_b"]            # (N, nq, D)


if __name__ == "__main__":
    # Small shapes consistent with the module's forward.
    N, L = 2, 8                 # batch, sequence length
    context_dim = 16            # kdim / vdim
    d_model = 32                # embed dim
    n_head = 4                  # -> head_dim = 8
    n_queries = 8

    key = jax.random.PRNGKey(0)
    ks = jax.random.split(key, 12)

    params = {
        "query":      jax.random.normal(ks[0], (n_queries, d_model), jnp.float32),
        "lnq_w":      1.0 + 0.1 * jax.random.normal(ks[1], (d_model,), jnp.float32),
        "lnq_b":      0.1 * jax.random.normal(ks[2], (d_model,), jnp.float32),
        "lnk_w":      1.0 + 0.1 * jax.random.normal(ks[3], (context_dim,), jnp.float32),
        "lnk_b":      0.1 * jax.random.normal(ks[4], (context_dim,), jnp.float32),
        "q_proj_w":   0.1 * jax.random.normal(ks[5], (d_model, d_model), jnp.float32),
        "k_proj_w":   0.1 * jax.random.normal(ks[6], (d_model, context_dim), jnp.float32),
        "v_proj_w":   0.1 * jax.random.normal(ks[7], (d_model, context_dim), jnp.float32),
        "in_proj_b":  0.1 * jax.random.normal(ks[8], (3 * d_model,), jnp.float32),
        "out_proj_w": 0.1 * jax.random.normal(ks[9], (d_model, d_model), jnp.float32),
        "out_proj_b": 0.1 * jax.random.normal(ks[10], (d_model,), jnp.float32),
    }

    x = jax.random.normal(ks[11], (N, L, context_dim), jnp.float32)

    out = attentional_pooler(x, params, n_head=n_head)
    out = jax.block_until_ready(out)

    ref = jax.block_until_ready(reference(x, params, n_head))
    assert out.shape == (N, n_queries, d_model), out.shape
    # bf16 matmul inputs / bf16 x (f32 accumulation, f32 LN & softmax) -> loosened tol.
    max_err = float(jnp.max(jnp.abs(out - ref)))
    assert jnp.allclose(out, ref, atol=5e-2, rtol=5e-2), max_err

    print("KERNEL_OK")
</pallas_src>

<mosaic_0001>
module attributes {stable_mosaic.version = 11 : i64} {
  func.func @attn_pooler_kernel(%arg0: i32, %arg1: memref<1x128x16xbf16, #tpu.memory_space<vmem>>, %arg2: memref<32x128xbf16, #tpu.memory_space<vmem>>, %arg3: memref<1x16xf32, #tpu.memory_space<vmem>>, %arg4: memref<1x16xf32, #tpu.memory_space<vmem>>, %arg5: memref<16x1024xbf16, #tpu.memory_space<vmem>>, %arg6: memref<1x1024xf32, #tpu.memory_space<vmem>>, %arg7: memref<512x32xbf16, #tpu.memory_space<vmem>>, %arg8: memref<1x32xf32, #tpu.memory_space<vmem>>, %arg9: memref<1x8x32xf32, #tpu.memory_space<vmem>>, %arg10: memref<32x128xf32, #tpu.memory_space<vmem>>, %arg11: memref<8x512xf32, #tpu.memory_space<vmem>>) attributes {dimension_semantics = [#tpu.dimension_semantics<parallel>], iteration_bounds = array<i64: 2>, scalar_prefetch = 0 : i64, scratch_operands = 2 : i64, tpu.core_type = #tpu.core_type<tc>, window_params = [{transform_indices = @transform_0, window_bounds = array<i64: 1, 128, 16>}, {pipeline_mode = #tpu.pipeline_mode<synchronous>, transform_indices = @transform_1, window_bounds = array<i64: 32, 128>}, {pipeline_mode = #tpu.pipeline_mode<synchronous>, transform_indices = @transform_2, window_bounds = array<i64: 1, 16>}, {pipeline_mode = #tpu.pipeline_mode<synchronous>, transform_indices = @transform_3, window_bounds = array<i64: 1, 16>}, {pipeline_mode = #tpu.pipeline_mode<synchronous>, transform_indices = @transform_4, window_bounds = array<i64: 16, 1024>}, {pipeline_mode = #tpu.pipeline_mode<synchronous>, transform_indices = @transform_5, window_bounds = array<i64: 1, 1024>}, {pipeline_mode = #tpu.pipeline_mode<synchronous>, transform_indices = @transform_6, window_bounds = array<i64: 512, 32>}, {pipeline_mode = #tpu.pipeline_mode<synchronous>, transform_indices = @transform_7, window_bounds = array<i64: 1, 32>}, {transform_indices = @transform_8, window_bounds = array<i64: 1, 8, 32>}]} {
    %c0 = arith.constant 0 : index
    %c0_0 = arith.constant 0 : index
    %c0_1 = arith.constant 0 : index
    %0 = vector.load %arg1[%c0, %c0_0, %c0_1] : memref<1x128x16xbf16, #tpu.memory_space<vmem>>, vector<1x128x16xbf16>
    %1 = vector.shape_cast %0 : vector<1x128x16xbf16> to vector<128x16xbf16>
    %2 = arith.extf %1 : vector<128x16xbf16> to vector<128x16xf32>
    %c0_2 = arith.constant 0 : index
    %c0_3 = arith.constant 0 : index
    %3 = vector.load %arg3[%c0_2, %c0_3] : memref<1x16xf32, #tpu.memory_space<vmem>>, vector<1x16xf32>
    %c0_4 = arith.constant 0 : index
    %c0_5 = arith.constant 0 : index
    %4 = vector.load %arg4[%c0_4, %c0_5] : memref<1x16xf32, #tpu.memory_space<vmem>>, vector<1x16xf32>
    %cst = arith.constant dense<0.000000e+00> : vector<128xf32>
    %5 = vector.multi_reduction <add>, %2, %cst [1] : vector<128x16xf32> to vector<128xf32>
    %6 = vector.shape_cast %5 : vector<128xf32> to vector<128x1xf32>
    %cst_6 = arith.constant 1.600000e+01 : f32
    %7 = vector.broadcast %cst_6 : f32 to vector<128x1xf32>
    %8 = arith.divf %6, %7 : vector<128x1xf32>
    %9 = vector.broadcast %8 : vector<128x1xf32> to vector<128x16xf32>
    %10 = arith.subf %2, %9 : vector<128x16xf32>
    %11 = arith.mulf %10, %10 : vector<128x16xf32>
    %cst_7 = arith.constant dense<0.000000e+00> : vector<128xf32>
    %12 = vector.multi_reduction <add>, %11, %cst_7 [1] : vector<128x16xf32> to vector<128xf32>
    %13 = vector.shape_cast %12 : vector<128xf32> to vector<128x1xf32>
    %cst_8 = arith.constant 1.600000e+01 : f32
    %14 = vector.broadcast %cst_8 : f32 to vector<128x1xf32>
    %15 = arith.divf %13, %14 : vector<128x1xf32>
    %16 = vector.broadcast %8 : vector<128x1xf32> to vector<128x16xf32>
    %17 = arith.subf %2, %16 : vector<128x16xf32>
    %cst_9 = arith.constant 9.99999974E-6 : f32
    %18 = vector.broadcast %cst_9 : f32 to vector<128x1xf32>
    %19 = arith.addf %15, %18 : vector<128x1xf32>
    %20 = math.rsqrt %19 : vector<128x1xf32>
    %21 = vector.broadcast %20 : vector<128x1xf32> to vector<128x16xf32>
    %22 = arith.mulf %17, %21 : vector<128x16xf32>
    %23 = vector.broadcast %3 : vector<1x16xf32> to vector<128x16xf32>
    %24 = arith.mulf %22, %23 : vector<128x16xf32>
    %25 = vector.broadcast %4 : vector<1x16xf32> to vector<128x16xf32>
    %26 = arith.addf %24, %25 : vector<128x16xf32>
    %27 = arith.truncf %26 : vector<128x16xf32> to vector<128x16xbf16>
    %c0_10 = arith.constant 0 : index
    %c0_11 = arith.constant 0 : index
    %28 = vector.load %arg5[%c0_10, %c0_11] : memref<16x1024xbf16, #tpu.memory_space<vmem>>, vector<16x1024xbf16>
    %cst_12 = arith.constant dense<0.000000e+00> : vector<128x1024xf32>
    %29 = tpu.matmul %27, %28, %cst_12 {dimension_numbers = #tpu.dot_dimension_numbers<[1], [0], [0], [1], [0, 0, 1, 1], [], []>} : vector<128x16xbf16>, vector<16x1024xbf16>, vector<128x1024xf32> -> vector<128x1024xf32>
    %c0_13 = arith.constant 0 : index
    %c0_14 = arith.constant 0 : index
    %30 = vector.load %arg6[%c0_13, %c0_14] : memref<1x1024xf32, #tpu.memory_space<vmem>>, vector<1x1024xf32>
    %31 = vector.broadcast %30 : vector<1x1024xf32> to vector<128x1024xf32>
    %32 = arith.addf %29, %31 : vector<128x1024xf32>
    %33 = arith.truncf %32 : vector<128x1024xf32> to vector<128x1024xbf16>
    %c0_15 = arith.constant 0 : index
    %c0_16 = arith.constant 0 : index
    %34 = vector.load %arg2[%c0_15, %c0_16] : memref<32x128xbf16, #tpu.memory_space<vmem>>, vector<32x128xbf16>
    %35 = tpu.iota {dimensions = array<i32: 1>} : vector<1x128xi32>
    %c8_i32 = arith.constant 8 : i32
    %36 = vector.broadcast %c8_i32 : i32 to vector<1x128xi32>
    %37 = arith.cmpi slt, %35, %36 : vector<1x128xi32>
    %cst_17 = arith.constant 0.000000e+00 : f32
    %cst_18 = arith.constant -1.000000e+30 : f32
    %38 = vector.broadcast %cst_17 : f32 to vector<1x128xf32>
    %39 = vector.broadcast %cst_18 : f32 to vector<1x128xf32>
    %40 = arith.select %37, %38, %39 : vector<1x128xi1>, vector<1x128xf32>
    %41 = vector.extract_strided_slice %34 {offsets = [0, 0], sizes = [8, 128], strides = [1, 1]} : vector<32x128xbf16> to vector<8x128xbf16>
    %42 = vector.extract_strided_slice %33 {offsets = [0, 0], sizes = [128, 128], strides = [1, 1]} : vector<128x1024xbf16> to vector<128x128xbf16>
    %cst_19 = arith.constant dense<0.000000e+00> : vector<8x128xf32>
    %43 = tpu.matmul %41, %42, %cst_19 {dimension_numbers = #tpu.dot_dimension_numbers<[1], [1], [0], [0], [0, 0, 1, 0], [], []>} : vector<8x128xbf16>, vector<128x128xbf16>, vector<8x128xf32> -> vector<8x128xf32>
    %c0_20 = arith.constant 0 : index
    %c0_21 = arith.constant 0 : index
    %44 = vector.load %arg10[%c0_20, %c0_21] : memref<32x128xf32, #tpu.memory_space<vmem>>, vector<8x128xf32>
    tpu.vector_store %arg10[%c0_20, %c0_21], %43 {strides = array<i32>} : memref<32x128xf32, #tpu.memory_space<vmem>>, vector<8x128xf32>,
    %45 = vector.extract_strided_slice %34 {offsets = [8, 0], sizes = [8, 128], strides = [1, 1]} : vector<32x128xbf16> to vector<8x128xbf16>
    %46 = vector.extract_strided_slice %33 {offsets = [0, 128], sizes = [128, 128], strides = [1, 1]} : vector<128x1024xbf16> to vector<128x128xbf16>
    %cst_22 = arith.constant dense<0.000000e+00> : vector<8x128xf32>
    %47 = tpu.matmul %45, %46, %cst_22 {dimension_numbers = #tpu.dot_dimension_numbers<[1], [1], [0], [0], [0, 0, 1, 0], [], []>} : vector<8x128xbf16>, vector<128x128xbf16>, vector<8x128xf32> -> vector<8x128xf32>
    %c8 = arith.constant 8 : index
    %c0_23 = arith.constant 0 : index
    %48 = vector.load %arg10[%c8, %c0_23] : memref<32x128xf32, #tpu.memory_space<vmem>>, vector<8x128xf32>
    tpu.vector_store %arg10[%c8, %c0_23], %47 {strides = array<i32>} : memref<32x128xf32, #tpu.memory_space<vmem>>, vector<8x128xf32>,
    %49 = vector.extract_strided_slice %34 {offsets = [16, 0], sizes = [8, 128], strides = [1, 1]} : vector<32x128xbf16> to vector<8x128xbf16>
    %50 = vector.extract_strided_slice %33 {offsets = [0, 256], sizes = [128, 128], strides = [1, 1]} : vector<128x1024xbf16> to vector<128x128xbf16>
    %cst_24 = arith.constant dense<0.000000e+00> : vector<8x128xf32>
    %51 = tpu.matmul %49, %50, %cst_24 {dimension_numbers = #tpu.dot_dimension_numbers<[1], [1], [0], [0], [0, 0, 1, 0], [], []>} : vector<8x128xbf16>, vector<128x128xbf16>, vector<8x128xf32> -> vector<8x128xf32>
    %c16 = arith.constant 16 : index
    %c0_25 = arith.constant 0 : index
    %52 = vector.load %arg10[%c16, %c0_25] : memref<32x128xf32, #tpu.memory_space<vmem>>, vector<8x128xf32>
    tpu.vector_store %arg10[%c16, %c0_25], %51 {strides = array<i32>} : memref<32x128xf32, #tpu.memory_space<vmem>>, vector<8x128xf32>,
    %53 = vector.extract_strided_slice %34 {offsets = [24, 0], sizes = [8, 128], strides = [1, 1]} : vector<32x128xbf16> to vector<8x128xbf16>
    %54 = vector.extract_strided_slice %33 {offsets = [0, 384], sizes = [128, 128], strides = [1, 1]} : vector<128x1024xbf16> to vector<128x128xbf16>
    %cst_26 = arith.constant dense<0.000000e+00> : vector<8x128xf32>
    %55 = tpu.matmul %53, %54, %cst_26 {dimension_numbers = #tpu.dot_dimension_numbers<[1], [1], [0], [0], [0, 0, 1, 0], [], []>} : vector<8x128xbf16>, vector<128x128xbf16>, vector<8x128xf32> -> vector<8x128xf32>
    %c24 = arith.constant 24 : index
    %c0_27 = arith.constant 0 : index
    %56 = vector.load %arg10[%c24, %c0_27] : memref<32x128xf32, #tpu.memory_space<vmem>>, vector<8x128xf32>
    tpu.vector_store %arg10[%c24, %c0_27], %55 {strides = array<i32>} : memref<32x128xf32, #tpu.memory_space<vmem>>, vector<8x128xf32>,
    %c0_28 = arith.constant 0 : index
    %c0_29 = arith.constant 0 : index
    %57 = vector.load %arg10[%c0_28, %c0_29] : memref<32x128xf32, #tpu.memory_space<vmem>>, vector<32x128xf32>
    %58 = vector.broadcast %40 : vector<1x128xf32> to vector<32x128xf32>
    %59 = arith.addf %57, %58 : vector<32x128xf32>
    %cst_30 = arith.constant dense<0xFF800000> : vector<32xf32>
    %60 = vector.multi_reduction <maximumf>, %59, %cst_30 [1] : vector<32x128xf32> to vector<32xf32>
    %61 = vector.shape_cast %60 : vector<32xf32> to vector<32x1xf32>
    %62 = vector.broadcast %61 : vector<32x1xf32> to vector<32x128xf32>
    %63 = arith.subf %59, %62 : vector<32x128xf32>
    %64 = math.exp %63 : vector<32x128xf32>
    %cst_31 = arith.constant dense<0.000000e+00> : vector<32xf32>
    %65 = vector.multi_reduction <add>, %64, %cst_31 [1] : vector<32x128xf32> to vector<32xf32>
    %66 = vector.shape_cast %65 : vector<32xf32> to vector<32x1xf32>
    %67 = tpu.reciprocal %66 {approx = true} : vector<32x1xf32> -> vector<32x1xf32>
    %68 = vector.broadcast %67 : vector<32x1xf32> to vector<32x128xf32>
    %69 = arith.mulf %64, %68 : vector<32x128xf32>
    %70 = arith.truncf %69 : vector<32x128xf32> to vector<32x128xbf16>
    %71 = vector.extract_strided_slice %70 {offsets = [0, 0], sizes = [8, 128], strides = [1, 1]} : vector<32x128xbf16> to vector<8x128xbf16>
    %72 = vector.extract_strided_slice %33 {offsets = [0, 512], sizes = [128, 128], strides = [1, 1]} : vector<128x1024xbf16> to vector<128x128xbf16>
    %cst_32 = arith.constant dense<0.000000e+00> : vector<8x128xf32>
    %73 = tpu.matmul %71, %72, %cst_32 {dimension_numbers = #tpu.dot_dimension_numbers<[1], [0], [0], [1], [0, 0, 1, 1], [], []>} : vector<8x128xbf16>, vector<128x128xbf16>, vector<8x128xf32> -> vector<8x128xf32>
    %c0_33 = arith.constant 0 : index
    %c0_34 = arith.constant 0 : index
    %74 = vector.load %arg11[%c0_33, %c0_34] : memref<8x512xf32, #tpu.memory_space<vmem>>, vector<8x128xf32>
    tpu.vector_store %arg11[%c0_33, %c0_34], %73 {strides = array<i32>} : memref<8x512xf32, #tpu.memory_space<vmem>>, vector<8x128xf32>,
    %75 = vector.extract_strided_slice %70 {offsets = [8, 0], sizes = [8, 128], strides = [1, 1]} : vector<32x128xbf16> to vector<8x128xbf16>
    %76 = vector.extract_strided_slice %33 {offsets = [0, 640], sizes = [128, 128], strides = [1, 1]} : vector<128x1024xbf16> to vector<128x128xbf16>
    %cst_35 = arith.constant dense<0.000000e+00> : vector<8x128xf32>
    %77 = tpu.matmul %75, %76, %cst_35 {dimension_numbers = #tpu.dot_dimension_numbers<[1], [0], [0], [1], [0, 0, 1, 1], [], []>} : vector<8x128xbf16>, vector<128x128xbf16>, vector<8x128xf32> -> vector<8x128xf32>
    %c0_36 = arith.constant 0 : index
    %c128 = arith.constant 128 : index
    %78 = vector.load %arg11[%c0_36, %c128] : memref<8x512xf32, #tpu.memory_space<vmem>>, vector<8x128xf32>
    tpu.vector_store %arg11[%c0_36, %c128], %77 {strides = array<i32>} : memref<8x512xf32, #tpu.memory_space<vmem>>, vector<8x128xf32>,
    %79 = vector.extract_strided_slice %70 {offsets = [16, 0], sizes = [8, 128], strides = [1, 1]} : vector<32x128xbf16> to vector<8x128xbf16>
    %80 = vector.extract_strided_slice %33 {offsets = [0, 768], sizes = [128, 128], strides = [1, 1]} : vector<128x1024xbf16> to vector<128x128xbf16>
    %cst_37 = arith.constant dense<0.000000e+00> : vector<8x128xf32>
    %81 = tpu.matmul %79, %80, %cst_37 {dimension_numbers = #tpu.dot_dimension_numbers<[1], [0], [0], [1], [0, 0, 1, 1], [], []>} : vector<8x128xbf16>, vector<128x128xbf16>, vector<8x128xf32> -> vector<8x128xf32>
    %c0_38 = arith.constant 0 : index
    %c256 = arith.constant 256 : index
    %82 = vector.load %arg11[%c0_38, %c256] : memref<8x512xf32, #tpu.memory_space<vmem>>, vector<8x128xf32>
    tpu.vector_store %arg11[%c0_38, %c256], %81 {strides = array<i32>} : memref<8x512xf32, #tpu.memory_space<vmem>>, vector<8x128xf32>,
    %83 = vector.extract_strided_slice %70 {offsets = [24, 0], sizes = [8, 128], strides = [1, 1]} : vector<32x128xbf16> to vector<8x128xbf16>
    %84 = vector.extract_strided_slice %33 {offsets = [0, 896], sizes = [128, 128], strides = [1, 1]} : vector<128x1024xbf16> to vector<128x128xbf16>
    %cst_39 = arith.constant dense<0.000000e+00> : vector<8x128xf32>
    %85 = tpu.matmul %83, %84, %cst_39 {dimension_numbers = #tpu.dot_dimension_numbers<[1], [0], [0], [1], [0, 0, 1, 1], [], []>} : vector<8x128xbf16>, vector<128x128xbf16>, vector<8x128xf32> -> vector<8x128xf32>
    %c0_40 = arith.constant 0 : index
    %c384 = arith.constant 384 : index
    %86 = vector.load %arg11[%c0_40, %c384] : memref<8x512xf32, #tpu.memory_space<vmem>>, vector<8x128xf32>
    tpu.vector_store %arg11[%c0_40, %c384], %85 {strides = array<i32>} : memref<8x512xf32, #tpu.memory_space<vmem>>, vector<8x128xf32>,
    %c0_41 = arith.constant 0 : index
    %c0_42 = arith.constant 0 : index
    %87 = vector.load %arg11[%c0_41, %c0_42] : memref<8x512xf32, #tpu.memory_space<vmem>>, vector<8x512xf32>
    %88 = arith.truncf %87 : vector<8x512xf32> to vector<8x512xbf16>
    %c0_43 = arith.constant 0 : index
    %c0_44 = arith.constant 0 : index
    %89 = vector.load %arg7[%c0_43, %c0_44] : memref<512x32xbf16, #tpu.memory_space<vmem>>, vector<512x32xbf16>
    %cst_45 = arith.constant dense<0.000000e+00> : vector<8x32xf32>
    %90 = tpu.matmul %88, %89, %cst_45 {dimension_numbers = #tpu.dot_dimension_numbers<[1], [0], [0], [1], [0, 0, 1, 1], [], []>} : vector<8x512xbf16>, vector<512x32xbf16>, vector<8x32xf32> -> vector<8x32xf32>
    %c0_46 = arith.constant 0 : index
    %c0_47 = arith.constant 0 : index
    %91 = vector.load %arg8[%c0_46, %c0_47] : memref<1x32xf32, #tpu.memory_space<vmem>>, vector<1x32xf32>
    %92 = vector.broadcast %91 : vector<1x32xf32> to vector<8x32xf32>
    %93 = arith.addf %90, %92 : vector<8x32xf32>
    %c0_48 = arith.constant 0 : index
    %c0_49 = arith.constant 0 : index
    %c0_50 = arith.constant 0 : index
    %94 = vector.load %arg9[%c0_48, %c0_49, %c0_50] : memref<1x8x32xf32, #tpu.memory_space<vmem>>, vector<1x8x32xf32>
    %95 = vector.shape_cast %94 : vector<1x8x32xf32> to vector<8x32xf32>
    %96 = vector.shape_cast %93 : vector<8x32xf32> to vector<1x8x32xf32>
    tpu.vector_store %arg9[%c0_48, %c0_49, %c0_50], %96 {strides = array<i32>} : memref<1x8x32xf32, #tpu.memory_space<vmem>>, vector<1x8x32xf32>,
    return
  }
  func.func @transform_0(%arg0: i32) -> (i32, i32, i32) {
    %c0_i32 = arith.constant 0 : i32
    %c0_i32_0 = arith.constant 0 : i32
    %c0_i32_1 = arith.constant 0 : i32
    return %arg0, %c0_i32, %c0_i32_0 : i32, i32, i32
  }
  func.func @transform_1(%arg0: i32) -> (i32, i32) {
    %c0_i32 = arith.constant 0 : i32
    %c0_i32_0 = arith.constant 0 : i32
    %c0_i32_1 = arith.constant 0 : i32
    return %c0_i32, %c0_i32_0 : i32, i32
  }
  func.func @transform_2(%arg0: i32) -> (i32, i32) {
    %c0_i32 = arith.constant 0 : i32
    %c0_i32_0 = arith.constant 0 : i32
    %c0_i32_1 = arith.constant 0 : i32
    return %c0_i32, %c0_i32_0 : i32, i32
  }
  func.func @transform_3(%arg0: i32) -> (i32, i32) {
    %c0_i32 = arith.constant 0 : i32
    %c0_i32_0 = arith.constant 0 : i32
    %c0_i32_1 = arith.constant 0 : i32
    return %c0_i32, %c0_i32_0 : i32, i32
  }
  func.func @transform_4(%arg0: i32) -> (i32, i32) {
    %c0_i32 = arith.constant 0 : i32
    %c0_i32_0 = arith.constant 0 : i32
    %c0_i32_1 = arith.constant 0 : i32
    return %c0_i32, %c0_i32_0 : i32, i32
  }
  func.func @transform_5(%arg0: i32) -> (i32, i32) {
    %c0_i32 = arith.constant 0 : i32
    %c0_i32_0 = arith.constant 0 : i32
    %c0_i32_1 = arith.constant 0 : i32
    return %c0_i32, %c0_i32_0 : i32, i32
  }
  func.func @transform_6(%arg0: i32) -> (i32, i32) {
    %c0_i32 = arith.constant 0 : i32
    %c0_i32_0 = arith.constant 0 : i32
    %c0_i32_1 = arith.constant 0 : i32
    return %c0_i32, %c0_i32_0 : i32, i32
  }
  func.func @transform_7(%arg0: i32) -> (i32, i32) {
    %c0_i32 = arith.constant 0 : i32
    %c0_i32_0 = arith.constant 0 : i32
    %c0_i32_1 = arith.constant 0 : i32
    return %c0_i32, %c0_i32_0 : i32, i32
  }
  func.func @transform_8(%arg0: i32) -> (i32, i32, i32) {
    %c0_i32 = arith.constant 0 : i32
    %c0_i32_0 = arith.constant 0 : i32
    %c0_i32_1 = arith.constant 0 : i32
    return %arg0, %c0_i32, %c0_i32_0 : i32, i32, i32
  }
}

</mosaic_0001>

<llo_original>
// kernel: attentional_pooler.1
$region0: #{attentional_pooler.1}
  #allocation0 [shape = 'u32[]', space=smem, size = 0x4, offset = 0x4, fixed_abs, tag = 'smem constant byte address 0x4 - core index']
  #allocation1 [shape = 'u32[144,128]{1,0:T(1,128)}', space=vmem, size = 0x12000, scoped, tag = 'internal scratch']
  #allocation2 [shape = 'f32[32,128]{1,0:T(8,128)}', space=vmem, size = 0x4000, scoped, tag = 'scratch operand']
  #allocation3 [shape = 'f32[8,512]{1,0:T(8,128)}', space=vmem, size = 0x4000, scoped, tag = 'scratch operand']
  %s0 = inlined_call_operand.vmem [shape: bf16[2,128,16], index: 0, kind: input, shape index: {}]
  %s1 = inlined_call_operand.vmem [shape: bf16[32,128], index: 1, kind: input, shape index: {}]
  %s2 = inlined_call_operand.vmem [shape: f32[1,16], index: 2, kind: input, shape index: {}]
  %s3 = inlined_call_operand.vmem [shape: f32[1,16], index: 3, kind: input, shape index: {}]
  %s4 = inlined_call_operand.vmem [shape: bf16[16,1024], index: 4, kind: input, shape index: {}]
  %s5 = inlined_call_operand.vmem [shape: f32[1,1024], index: 5, kind: input, shape index: {}]
  %s6 = inlined_call_operand.vmem [shape: bf16[512,32], index: 6, kind: input, shape index: {}]
  %s7 = inlined_call_operand.vmem [shape: f32[1,32], index: 7, kind: input, shape index: {}]
  %s8 = inlined_call_operand.hbm [shape: f32[2,8,32], index: 8, kind: output, shape index: {}]
  %s9 = sld [smem:[#allocation0]]
  $region65: #{attentional_pooler.1} parent=0
    _
  %s11 = ssub.s32 1, %s9
  %s12 = scalar_select 0, %s11, %s9
  $region1: #{attentional_pooler.1} parent=0
    #allocation4 [shape = 'u8[8192]{0}', space=vmem, size = 0x2000, scoped, tag = 'output window, operand 0']
    #allocation5 [shape = 's32[2]{0}', space=sflag, size = 0x8, scoped, tag = 'scoped memory for attentional_pooler.1']
    %13 = vsyncpa [#allocation5], 0
    %s14 = scalar_lea.sflag [#allocation5], 1
    %15 = vsyncpa %s14, 0
    loop: start=0, step=1, limit=4
    $region2: #{attentional_pooler.1} parent=1 // loop_pre_header
      _
    $region3: #{attentional_pooler.1} parent=1 // loop_header
      %s17 = sphi 0, %s21
      %p18 = scmp.ge.s32.totalorder %s17, 4
      %s27 = sphi 0, %s29
      %s30 = sphi 0, %s27
      %s31 = sphi 0, %s30
      %s47 = sphi 0, %s31
      %s51 = sphi 0, %s51
      %s53 = sphi 0, %s51
      %s54 = sphi 0, %s53
      %s68 = sphi 0, %s54
      %s72 = sphi 0, %s72
      %s74 = sphi 0, %s72
      %s75 = sphi 0, %s74
      %s89 = sphi 0, %s75
      %s93 = sphi 0, %s93
      %s95 = sphi 0, %s93
      %s96 = sphi 0, %s95
      %s110 = sphi 0, %s96
      %s114 = sphi 0, %s114
      %s116 = sphi 0, %s114
      %s117 = sphi 0, %s116
      %s131 = sphi 0, %s117
      %s135 = sphi 0, %s135
      %s137 = sphi 0, %s135
      %s138 = sphi 0, %s137
      %s152 = sphi 0, %s138
      %s156 = sphi 0, %s156
      %s158 = sphi 0, %s156
      %s159 = sphi 0, %s158
      %s173 = sphi 0, %s159
      %s177 = sphi 0, %s177
      %s179 = sphi 0, %s177
      %s180 = sphi 0, %s179
      %s194 = sphi 0, %s180
      %s200 = sphi 0, %s202
      %s203 = sphi 0, %s200
      %s204 = sphi 0, %s203
      %s220 = sphi 0, %s204
    $region4: #{attentional_pooler.1} parent=1 // loop_header_branch
      %20 = sbr.rel (%p18) target = $region8
    $region5: #{attentional_pooler.1} parent=1 // loop_body
      %s22 = ssub.s32 %s17, 1
      %s23 = ssub.s32 %s17, 2
      %s24 = sadd.s32 %s17, 1
      %s25 = ssub.s32 %s17, %s24
      %p26 = scmp.eq.s32.totalorder %s25, 0
      %s28 = sadd.s32 %s27, 1
      %s29 = scalar_select %p26, %s27, %s28
      %p32 = pneg %p26
      %p33 = scmp.eq.s32.totalorder %s17, 1
      %p34 = por %p32, %p33
      %p35 = scmp.ne.s32.totalorder %s27, %s30
      %p36 = scmp.eq.s32.totalorder %s17, 0
      %p37 = por %p35, %p36
      %p38 = scmp.ne.s32.totalorder %s27, %s30
      %p39 = scmp.eq.s32.totalorder %s22, 1
      %p40 = por %p38, %p39
      %p41 = scmp.ne.s32.totalorder %s30, %s31
      %p42 = scmp.eq.s32.totalorder %s22, 0
      %p43 = por %p41, %p42
      %p44 = scmp.ne.s32.totalorder %s30, %s31
      %p45 = scmp.eq.s32.totalorder %s23, 1
      %p46 = por %p44, %p45
      %p48 = scmp.ne.s32.totalorder %s31, %s47
      %p49 = scmp.eq.s32.totalorder %s23, 0
      %p50 = por %p48, %p49
      %s52 = sadd.s32 %s51, 1
      %p55 = scmp.eq.s32.totalorder %s17, 1
      %p56 = scmp.ne.s32.totalorder %s51, %s53
      %p57 = scmp.eq.s32.totalorder %s17, 0
      %p58 = por %p56, %p57
      %p59 = scmp.ne.s32.totalorder %s51, %s53
      %p60 = scmp.eq.s32.totalorder %s22, 1
      %p61 = por %p59, %p60
      %p62 = scmp.ne.s32.totalorder %s53, %s54
      %p63 = scmp.eq.s32.totalorder %s22, 0
      %p64 = por %p62, %p63
      %p65 = scmp.ne.s32.totalorder %s53, %s54
      %p66 = scmp.eq.s32.totalorder %s23, 1
      %p67 = por %p65, %p66
      %p69 = scmp.ne.s32.totalorder %s54, %s68
      %p70 = scmp.eq.s32.totalorder %s23, 0
      %p71 = por %p69, %p70
      %s73 = sadd.s32 %s72, 1
      %p76 = scmp.eq.s32.totalorder %s17, 1
      %p77 = scmp.ne.s32.totalorder %s72, %s74
      %p78 = scmp.eq.s32.totalorder %s17, 0
      %p79 = por %p77, %p78
      %p80 = scmp.ne.s32.totalorder %s72, %s74
      %p81 = scmp.eq.s32.totalorder %s22, 1
      %p82 = por %p80, %p81
      %p83 = scmp.ne.s32.totalorder %s74, %s75
      %p84 = scmp.eq.s32.totalorder %s22, 0
      %p85 = por %p83, %p84
      %p86 = scmp.ne.s32.totalorder %s74, %s75
      %p87 = scmp.eq.s32.totalorder %s23, 1
      %p88 = por %p86, %p87
      %p90 = scmp.ne.s32.totalorder %s75, %s89
      %p91 = scmp.eq.s32.totalorder %s23, 0
      %p92 = por %p90, %p91
      %s94 = sadd.s32 %s93, 1
      %p97 = scmp.eq.s32.totalorder %s17, 1
      %p98 = scmp.ne.s32.totalorder %s93, %s95
      %p99 = scmp.eq.s32.totalorder %s17, 0
      %p100 = por %p98, %p99
      %p101 = scmp.ne.s32.totalorder %s93, %s95
      %p102 = scmp.eq.s32.totalorder %s22, 1
      %p103 = por %p101, %p102
      %p104 = scmp.ne.s32.totalorder %s95, %s96
      %p105 = scmp.eq.s32.totalorder %s22, 0
      %p106 = por %p104, %p105
      %p107 = scmp.ne.s32.totalorder %s95, %s96
      %p108 = scmp.eq.s32.totalorder %s23, 1
      %p109 = por %p107, %p108
      %p111 = scmp.ne.s32.totalorder %s96, %s110
      %p112 = scmp.eq.s32.totalorder %s23, 0
      %p113 = por %p111, %p112
      %s115 = sadd.s32 %s114, 1
      %p118 = scmp.eq.s32.totalorder %s17, 1
      %p119 = scmp.ne.s32.totalorder %s114, %s116
      %p120 = scmp.eq.s32.totalorder %s17, 0
      %p121 = por %p119, %p120
      %p122 = scmp.ne.s32.totalorder %s114, %s116
      %p123 = scmp.eq.s32.totalorder %s22, 1
      %p124 = por %p122, %p123
      %p125 = scmp.ne.s32.totalorder %s116, %s117
      %p126 = scmp.eq.s32.totalorder %s22, 0
      %p127 = por %p125, %p126
      %p128 = scmp.ne.s32.totalorder %s116, %s117
      %p129 = scmp.eq.s32.totalorder %s23, 1
      %p130 = por %p128, %p129
      %p132 = scmp.ne.s32.totalorder %s117, %s131
      %p133 = scmp.eq.s32.totalorder %s23, 0
      %p134 = por %p132, %p133
      %s136 = sadd.s32 %s135, 1
      %p139 = scmp.eq.s32.totalorder %s17, 1
      %p140 = scmp.ne.s32.totalorder %s135, %s137
      %p141 = scmp.eq.s32.totalorder %s17, 0
      %p142 = por %p140, %p141
      %p143 = scmp.ne.s32.totalorder %s135, %s137
      %p144 = scmp.eq.s32.totalorder %s22, 1
      %p145 = por %p143, %p144
      %p146 = scmp.ne.s32.totalorder %s137, %s138
      %p147 = scmp.eq.s32.totalorder %s22, 0
      %p148 = por %p146, %p147
      %p149 = scmp.ne.s32.totalorder %s137, %s138
      %p150 = scmp.eq.s32.totalorder %s23, 1
      %p151 = por %p149, %p150
      %p153 = scmp.ne.s32.totalorder %s138, %s152
      %p154 = scmp.eq.s32.totalorder %s23, 0
      %p155 = por %p153, %p154
      %s157 = sadd.s32 %s156, 1
      %p160 = scmp.eq.s32.totalorder %s17, 1
      %p161 = scmp.ne.s32.totalorder %s156, %s158
      %p162 = scmp.eq.s32.totalorder %s17, 0
      %p163 = por %p161, %p162
      %p164 = scmp.ne.s32.totalorder %s156, %s158
      %p165 = scmp.eq.s32.totalorder %s22, 1
      %p166 = por %p164, %p165
      %p167 = scmp.ne.s32.totalorder %s158, %s159
      %p168 = scmp.eq.s32.totalorder %s22, 0
      %p169 = por %p167, %p168
      %p170 = scmp.ne.s32.totalorder %s158, %s159
      %p171 = scmp.eq.s32.totalorder %s23, 1
      %p172 = por %p170, %p171
      %p174 = scmp.ne.s32.totalorder %s159, %s173
      %p175 = scmp.eq.s32.totalorder %s23, 0
      %p176 = por %p174, %p175
      %s178 = sadd.s32 %s177, 1
      %p181 = scmp.eq.s32.totalorder %s17, 1
      %p182 = scmp.ne.s32.totalorder %s177, %s179
      %p183 = scmp.eq.s32.totalorder %s17, 0
      %p184 = por %p182, %p183
      %p185 = scmp.ne.s32.totalorder %s177, %s179
      %p186 = scmp.eq.s32.totalorder %s22, 1
      %p187 = por %p185, %p186
      %p188 = scmp.ne.s32.totalorder %s179, %s180
      %p189 = scmp.eq.s32.totalorder %s22, 0
      %p190 = por %p188, %p189
      %p191 = scmp.ne.s32.totalorder %s179, %s180
      %p192 = scmp.eq.s32.totalorder %s23, 1
      %p193 = por %p191, %p192
      %p195 = scmp.ne.s32.totalorder %s180, %s194
      %p196 = scmp.eq.s32.totalorder %s23, 0
      %p197 = por %p195, %p196
      %s198 = ssub.s32 %s17, %s24
      %p199 = scmp.eq.s32.totalorder %s198, 0
      %s201 = sadd.s32 %s200, 1
      %s202 = scalar_select %p199, %s200, %s201
      %p205 = pneg %p199
      %p206 = scmp.eq.s32.totalorder %s17, 1
      %p207 = por %p205, %p206
      %p208 = scmp.ne.s32.totalorder %s200, %s203
      %p209 = scmp.eq.s32.totalorder %s17, 0
      %p210 = por %p208, %p209
      %p211 = scmp.ne.s32.totalorder %s200, %s203
      %p212 = scmp.eq.s32.totalorder %s22, 1
      %p213 = por %p211, %p212
      %p214 = scmp.ne.s32.totalorder %s203, %s204
      %p215 = scmp.eq.s32.totalorder %s22, 0
      %p216 = por %p214, %p215
      %p217 = scmp.ne.s32.totalorder %s203, %s204
      %p218 = scmp.eq.s32.totalorder %s23, 1
      %p219 = por %p217, %p218
      %p221 = scmp.ne.s32.totalorder %s204, %s220
      %p222 = scmp.eq.s32.totalorder %s23, 0
      %p223 = por %p221, %p222
      %p224 = scmp.le.s32.totalorder 1, %s17
      %p225 = scmp.lt.s32.totalorder %s17, 3
      %p226 = pnand %p224, %p225
      %p227 = pneg %p226
      // Predicated region
      $region9: #{attentional_pooler.1} parent=5 // pred_check
        _
      $region10: #{attentional_pooler.1} parent=5 // pred_check_branch
        %229 = sbr.rel (%p226) target = $region12
      $region11: #{attentional_pooler.1} parent=5 // pred_region
        %s230 = ssub.s32 %s17, 1
        // Predicated region
        $region13: #{attentional_pooler.1} parent=11 // pred_check
          %p231 = pneg %p64
        $region14: #{attentional_pooler.1} parent=11 // pred_check_branch
          %233 = sbr.rel (%p231) target = $region16
        $region15: #{attentional_pooler.1} parent=11 // pred_region
          _
        $region16: #{attentional_pooler.1} parent=11 // pred_fallthru
          _
        // Predicated region
        $region17: #{attentional_pooler.1} parent=11 // pred_check
          %p234 = pneg %p85
        $region18: #{attentional_pooler.1} parent=11 // pred_check_branch
          %236 = sbr.rel (%p234) target = $region20
        $region19: #{attentional_pooler.1} parent=11 // pred_region
          _
        $region20: #{attentional_pooler.1} parent=11 // pred_fallthru
          _
        // Predicated region
        $region21: #{attentional_pooler.1} parent=11 // pred_check
          %p237 = pneg %p106
        $region22: #{attentional_pooler.1} parent=11 // pred_check_branch
          %239 = sbr.rel (%p237) target = $region24
        $region23: #{attentional_pooler.1} parent=11 // pred_region
          _
        $region24: #{attentional_pooler.1} parent=11 // pred_fallthru
          _
        // Predicated region
        $region25: #{attentional_pooler.1} parent=11 // pred_check
          %p240 = pneg %p127
        $region26: #{attentional_pooler.1} parent=11 // pred_check_branch
          %242 = sbr.rel (%p240) target = $region28
        $region27: #{attentional_pooler.1} parent=11 // pred_region
          _
        $region28: #{attentional_pooler.1} parent=11 // pred_fallthru
          _
        // Predicated region
        $region29: #{attentional_pooler.1} parent=11 // pred_check
          %p243 = pneg %p148
        $region30: #{attentional_pooler.1} parent=11 // pred_check_branch
          %245 = sbr.rel (%p243) target = $region32
        $region31: #{attentional_pooler.1} parent=11 // pred_region
          _
        $region32: #{attentional_pooler.1} parent=11 // pred_fallthru
          _
        // Predicated region
        $region33: #{attentional_pooler.1} parent=11 // pred_check
          %p246 = pneg %p169
        $region34: #{attentional_pooler.1} parent=11 // pred_check_branch
          %248 = sbr.rel (%p246) target = $region36
        $region35: #{attentional_pooler.1} parent=11 // pred_region
          _
        $region36: #{attentional_pooler.1} parent=11 // pred_fallthru
          _
        // Predicated region
        $region37: #{attentional_pooler.1} parent=11 // pred_check
          %p249 = pneg %p190
        $region38: #{attentional_pooler.1} parent=11 // pred_check_branch
          %251 = sbr.rel (%p249) target = $region40
        $region39: #{attentional_pooler.1} parent=11 // pred_region
          _
        $region40: #{attentional_pooler.1} parent=11 // pred_fallthru
          _
      $region12: #{attentional_pooler.1} parent=5 // pred_fallthru
        _
      %p252 = scmp.lt.s32.totalorder %s17, 2
      // Predicated region
      $region41: #{attentional_pooler.1} parent=5 // pred_check
        %p253 = pneg %p252
      $region42: #{attentional_pooler.1} parent=5 // pred_check_branch
        %255 = sbr.rel (%p253) target = $region44
      $region43: #{attentional_pooler.1} parent=5 // pred_region
        // Predicated region
        $region45: #{attentional_pooler.1} parent=43 // pred_check
          %p256 = pneg %p37
        $region46: #{attentional_pooler.1} parent=43 // pred_check_branch
          %258 = sbr.rel (%p256) target = $region48
        $region47: #{attentional_pooler.1} parent=43 // pred_region
          %p259 = scmp.lt.s32.totalorder %s17, 1
          %s260 = scalar_select %p259, %s17, 1
          %s261 = smul.addr %s260, 16
          %s262 = smul.addr %s261, 4
          %s263 = scalar_lea.vmem %s0, %s262
        $region48: #{attentional_pooler.1} parent=43 // pred_fallthru
          _
      $region44: #{attentional_pooler.1} parent=5 // pred_fallthru
        _
      %p264 = scmp.le.s32.totalorder 1, %s17
      %p265 = scmp.lt.s32.totalorder %s17, 3
      %p266 = pnand %p264, %p265
      %p267 = pneg %p266
      // Predicated region
      $region49: #{attentional_pooler.1} parent=5 // pred_check
        _
      $region50: #{attentional_pooler.1} parent=5 // pred_check_branch
        %269 = sbr.rel (%p266) target = $region52
      $region51: #{attentional_pooler.1} parent=5 // pred_region
        %s270 = ssub.s32 %s17, 1
        %p271 = scmp.lt.s32.totalorder %s22, 1
        %s272 = scalar_select %p271, %s22, 1
        %s273 = smul.addr %s272, 16
        %s274 = smul.addr %s273, 4
        %s275 = scalar_lea.vmem %s0, %s274
        %p276 = pneg %p43
        %p277 = pneg %p40
        %p278 = pneg %p64
        %p279 = pneg %p61
        %p280 = pneg %p85
        %p281 = pneg %p82
        %p282 = pneg %p106
        %p283 = pneg %p103
        %p284 = pneg %p127
        %p285 = pneg %p124
        %p286 = pneg %p148
        %p287 = pneg %p145
        %p288 = pneg %p169
        %p289 = pneg %p166
        %p290 = pneg %p190
        %p291 = pneg %p187
        %p292 = pneg %p216
        %p293 = pneg %p213
        %s294 = sand.u32 %s203, 1
        %s295 = scalar_lea.sflag [#allocation5], %s294
        %s296 = sand.u32 %s203, 1
        %s297 = smul.addr %s296, 8
        %s298 = scalar_lea.vmem [#allocation4], %s297
        %p299 = scmp.lt.s32.totalorder %s22, 1
        %s300 = scalar_select %p299, %s22, 1
        %s301 = smul.addr %s300, 16
        %s302 = smul.addr %s301, 4
        %s303 = scalar_lea.vmem %s0, %s302
        %v305 = vld [vmem:[%s303] sm:$0xf]
        %v306 = vld [vmem:[%s303 + $0x4] sm:$0xf]
        %v307 = vld [vmem:[%s303 + $0x8] sm:$0xf]
        %v308 = vld [vmem:[%s303 + $0xc] sm:$0xf]
        %v309 = vld [vmem:[%s303 + $0x10] sm:$0xf]
        %v310 = vld [vmem:[%s303 + $0x14] sm:$0xf]
        %v311 = vld [vmem:[%s303 + $0x18] sm:$0xf]
        %v312 = vld [vmem:[%s303 + $0x1c] sm:$0xf]
        %v313 = vld [vmem:[%s303 + $0x20] sm:$0xf]
        %v314 = vld [vmem:[%s303 + $0x24] sm:$0xf]
        %v315 = vld [vmem:[%s303 + $0x28] sm:$0xf]
        %v316 = vld [vmem:[%s303 + $0x2c] sm:$0xf]
        %v317 = vld [vmem:[%s303 + $0x30] sm:$0xf]
        %v318 = vld [vmem:[%s303 + $0x34] sm:$0xf]
        %v319 = vld [vmem:[%s303 + $0x38] sm:$0xf]
        %v320 = vld [vmem:[%s303 + $0x3c] sm:$0xf]
        %v321 = vunpack.c.l.bf16 %v305
        %v322 = vunpack.c.l.bf16 %v306
        %v323 = vunpack.c.l.bf16 %v307
        %v324 = vunpack.c.l.bf16 %v308
        %v325 = vunpack.c.l.bf16 %v309
        %v326 = vunpack.c.l.bf16 %v310
        %v327 = vunpack.c.l.bf16 %v311
        %v328 = vunpack.c.l.bf16 %v312
        %v329 = vunpack.c.l.bf16 %v313
        %v330 = vunpack.c.l.bf16 %v314
        %v331 = vunpack.c.l.bf16 %v315
        %v332 = vunpack.c.l.bf16 %v316
        %v333 = vunpack.c.l.bf16 %v317
        %v334 = vunpack.c.l.bf16 %v318
        %v335 = vunpack.c.l.bf16 %v319
        %v336 = vunpack.c.l.bf16 %v320
        %v337 = vld [vmem:[%s2] sm:$0x1]
        %v338 = vld [vmem:[%s3] sm:$0x1]
        %vm339 = vcmask 130048
        %v340 = vsel %vm339, %v321, 0.0
        %341 = vadd.xlane.f32.xlu0 %v340
        %v342 = vpop.xlane.xlu0 %341
        %v343 = vsel %vm339, %v322, 0.0
        %344 = vadd.xlane.f32.xlu0 %v343
        %v345 = vpop.xlane.xlu0 %344
        %v346 = vsel %vm339, %v323, 0.0
        %347 = vadd.xlane.f32.xlu0 %v346
        %v348 = vpop.xlane.xlu0 %347
        %v349 = vsel %vm339, %v324, 0.0
        %350 = vadd.xlane.f32.xlu0 %v349
        %v351 = vpop.xlane.xlu0 %350
        %v352 = vsel %vm339, %v325, 0.0
        %353 = vadd.xlane.f32.xlu0 %v352
        %v354 = vpop.xlane.xlu0 %353
        %v355 = vsel %vm339, %v326, 0.0
        %356 = vadd.xlane.f32.xlu0 %v355
        %v357 = vpop.xlane.xlu0 %356
        %v358 = vsel %vm339, %v327, 0.0
        %359 = vadd.xlane.f32.xlu0 %v358
        %v360 = vpop.xlane.xlu0 %359
        %v361 = vsel %vm339, %v328, 0.0
        %362 = vadd.xlane.f32.xlu0 %v361
        %v363 = vpop.xlane.xlu0 %362
        %v364 = vsel %vm339, %v329, 0.0
        %365 = vadd.xlane.f32.xlu0 %v364
        %v366 = vpop.xlane.xlu0 %365
        %v367 = vsel %vm339, %v330, 0.0
        %368 = vadd.xlane.f32.xlu0 %v367
        %v369 = vpop.xlane.xlu0 %368
        %v370 = vsel %vm339, %v331, 0.0
        %371 = vadd.xlane.f32.xlu0 %v370
        %v372 = vpop.xlane.xlu0 %371
        %v373 = vsel %vm339, %v332, 0.0
        %374 = vadd.xlane.f32.xlu0 %v373
        %v375 = vpop.xlane.xlu0 %374
        %v376 = vsel %vm339, %v333, 0.0
        %377 = vadd.xlane.f32.xlu0 %v376
        %v378 = vpop.xlane.xlu0 %377
        %v379 = vsel %vm339, %v334, 0.0
        %380 = vadd.xlane.f32.xlu0 %v379
        %v381 = vpop.xlane.xlu0 %380
        %v382 = vsel %vm339, %v335, 0.0
        %383 = vadd.xlane.f32.xlu0 %v382
        %v384 = vpop.xlane.xlu0 %383
        %v385 = vsel %vm339, %v336, 0.0
        %386 = vadd.xlane.f32.xlu0 %v385
        %v387 = vpop.xlane.xlu0 %386
        %v388 = vrcp.pop 16.0
        %v389 = vmul.f32 %v342, %v388
        %v390 = vmul.f32 %v345, %v388
        %v391 = vmul.f32 %v348, %v388
        %v392 = vmul.f32 %v351, %v388
        %v393 = vmul.f32 %v354, %v388
        %v394 = vmul.f32 %v357, %v388
        %v395 = vmul.f32 %v360, %v388
        %v396 = vmul.f32 %v363, %v388
        %v397 = vmul.f32 %v366, %v388
        %v398 = vmul.f32 %v369, %v388
        %v399 = vmul.f32 %v372, %v388
        %v400 = vmul.f32 %v375, %v388
        %v401 = vmul.f32 %v378, %v388
        %v402 = vmul.f32 %v381, %v388
        %v403 = vmul.f32 %v384, %v388
        %v404 = vmul.f32 %v387, %v388
        %v405 = vsub.f32 %v321, %v389
        %v406 = vsub.f32 %v322, %v390
        %v407 = vsub.f32 %v323, %v391
        %v408 = vsub.f32 %v324, %v392
        %v409 = vsub.f32 %v325, %v393
        %v410 = vsub.f32 %v326, %v394
        %v411 = vsub.f32 %v327, %v395
        %v412 = vsub.f32 %v328, %v396
        %v413 = vsub.f32 %v329, %v397
        %v414 = vsub.f32 %v330, %v398
        %v415 = vsub.f32 %v331, %v399
        %v416 = vsub.f32 %v332, %v400
        %v417 = vsub.f32 %v333, %v401
        %v418 = vsub.f32 %v334, %v402
        %v419 = vsub.f32 %v335, %v403
        %v420 = vsub.f32 %v336, %v404
        %v421 = vmul.f32 %v405, %v405
        %v422 = vmul.f32 %v406, %v406
        %v423 = vmul.f32 %v407, %v407
        %v424 = vmul.f32 %v408, %v408
        %v425 = vmul.f32 %v409, %v409
        %v426 = vmul.f32 %v410, %v410
        %v427 = vmul.f32 %v411, %v411
        %v428 = vmul.f32 %v412, %v412
        %v429 = vmul.f32 %v413, %v413
        %v430 = vmul.f32 %v414, %v414
        %v431 = vmul.f32 %v415, %v415
        %v432 = vmul.f32 %v416, %v416
        %v433 = vmul.f32 %v417, %v417
        %v434 = vmul.f32 %v418, %v418
        %v435 = vmul.f32 %v419, %v419
        %v436 = vmul.f32 %v420, %v420
        %v437 = vsel %vm339, %v421, 0.0
        %438 = vadd.xlane.f32.xlu0 %v437
        %v439 = vpop.xlane.xlu0 %438
        %v440 = vsel %vm339, %v422, 0.0
        %441 = vadd.xlane.f32.xlu0 %v440
        %v442 = vpop.xlane.xlu0 %441
        %v443 = vsel %vm339, %v423, 0.0
        %444 = vadd.xlane.f32.xlu0 %v443
        %v445 = vpop.xlane.xlu0 %444
        %v446 = vsel %vm339, %v424, 0.0
        %447 = vadd.xlane.f32.xlu0 %v446
        %v448 = vpop.xlane.xlu0 %447
        %v449 = vsel %vm339, %v425, 0.0
        %450 = vadd.xlane.f32.xlu0 %v449
        %v451 = vpop.xlane.xlu0 %450
        %v452 = vsel %vm339, %v426, 0.0
        %453 = vadd.xlane.f32.xlu0 %v452
        %v454 = vpop.xlane.xlu0 %453
        %v455 = vsel %vm339, %v427, 0.0
        %456 = vadd.xlane.f32.xlu0 %v455
        %v457 = vpop.xlane.xlu0 %456
        %v458 = vsel %vm339, %v428, 0.0
        %459 = vadd.xlane.f32.xlu0 %v458
        %v460 = vpop.xlane.xlu0 %459
        %v461 = vsel %vm339, %v429, 0.0
        %462 = vadd.xlane.f32.xlu0 %v461
        %v463 = vpop.xlane.xlu0 %462
        %v464 = vsel %vm339, %v430, 0.0
        %465 = vadd.xlane.f32.xlu0 %v464
        %v466 = vpop.xlane.xlu0 %465
        %v467 = vsel %vm339, %v431, 0.0
        %468 = vadd.xlane.f32.xlu0 %v467
        %v469 = vpop.xlane.xlu0 %468
        %v470 = vsel %vm339, %v432, 0.0
        %471 = vadd.xlane.f32.xlu0 %v470
        %v472 = vpop.xlane.xlu0 %471
        %v473 = vsel %vm339, %v433, 0.0
        %474 = vadd.xlane.f32.xlu0 %v473
        %v475 = vpop.xlane.xlu0 %474
        %v476 = vsel %vm339, %v434, 0.0
        %477 = vadd.xlane.f32.xlu0 %v476
        %v478 = vpop.xlane.xlu0 %477
        %v479 = vsel %vm339, %v435, 0.0
        %480 = vadd.xlane.f32.xlu0 %v479
        %v481 = vpop.xlane.xlu0 %480
        %v482 = vsel %vm339, %v436, 0.0
        %483 = vadd.xlane.f32.xlu0 %v482
        %v484 = vpop.xlane.xlu0 %483
        %v485 = vmul.f32 %v439, %v388
        %v486 = vmul.f32 %v442, %v388
        %v487 = vmul.f32 %v445, %v388
        %v488 = vmul.f32 %v448, %v388
        %v489 = vmul.f32 %v451, %v388
        %v490 = vmul.f32 %v454, %v388
        %v491 = vmul.f32 %v457, %v388
        %v492 = vmul.f32 %v460, %v388
        %v493 = vmul.f32 %v463, %v388
        %v494 = vmul.f32 %v466, %v388
        %v495 = vmul.f32 %v469, %v388
        %v496 = vmul.f32 %v472, %v388
        %v497 = vmul.f32 %v475, %v388
        %v498 = vmul.f32 %v478, %v388
        %v499 = vmul.f32 %v481, %v388
        %v500 = vmul.f32 %v484, %v388
        %v501 = vadd.f32 %v485, 1e-05
        %v502 = vadd.f32 %v486, 1e-05
        %v503 = vadd.f32 %v487, 1e-05
        %v504 = vadd.f32 %v488, 1e-05
        %v505 = vadd.f32 %v489, 1e-05
        %v506 = vadd.f32 %v490, 1e-05
        %v507 = vadd.f32 %v491, 1e-05
        %v508 = vadd.f32 %v492, 1e-05
        %v509 = vadd.f32 %v493, 1e-05
        %v510 = vadd.f32 %v494, 1e-05
        %v511 = vadd.f32 %v495, 1e-05
        %v512 = vadd.f32 %v496, 1e-05
        %v513 = vadd.f32 %v497, 1e-05
        %v514 = vadd.f32 %v498, 1e-05
        %v515 = vadd.f32 %v499, 1e-05
        %v516 = vadd.f32 %v500, 1e-05
        %v517 = vrsqrt.pop %v501
        %v518 = vrsqrt.pop %v502
        %v519 = vrsqrt.pop %v503
        %v520 = vrsqrt.pop %v504
        %v521 = vrsqrt.pop %v505
        %v522 = vrsqrt.pop %v506
        %v523 = vrsqrt.pop %v507
        %v524 = vrsqrt.pop %v508
        %v525 = vrsqrt.pop %v509
        %v526 = vrsqrt.pop %v510
        %v527 = vrsqrt.pop %v511
        %v528 = vrsqrt.pop %v512
        %v529 = vrsqrt.pop %v513
        %v530 = vrsqrt.pop %v514
        %v531 = vrsqrt.pop %v515
        %v532 = vrsqrt.pop %v516
        %v533 = vmul.f32 %v405, %v517
        %v534 = vmul.f32 %v406, %v518
        %v535 = vmul.f32 %v407, %v519
        %v536 = vmul.f32 %v408, %v520
        %v537 = vmul.f32 %v409, %v521
        %v538 = vmul.f32 %v410, %v522
        %v539 = vmul.f32 %v411, %v523
        %v540 = vmul.f32 %v412, %v524
        %v541 = vmul.f32 %v413, %v525
        %v542 = vmul.f32 %v414, %v526
        %v543 = vmul.f32 %v415, %v527
        %v544 = vmul.f32 %v416, %v528
        %v545 = vmul.f32 %v417, %v529
        %v546 = vmul.f32 %v418, %v530
        %v547 = vmul.f32 %v419, %v531
        %v548 = vmul.f32 %v420, %v532
        %v550 = vlaneseq
        %v551 = vshrl.u32 %v550, 7
        %v552 = vsub.s32 0, %v551
        %v553 = vrot.slane %v337, %v552
        %v555 = vmul.f32 %v533, %v553
        %v556 = vmul.f32 %v534, %v553
        %v557 = vmul.f32 %v535, %v553
        %v558 = vmul.f32 %v536, %v553
        %v559 = vmul.f32 %v537, %v553
        %v560 = vmul.f32 %v538, %v553
        %v561 = vmul.f32 %v539, %v553
        %v562 = vmul.f32 %v540, %v553
        %v563 = vmul.f32 %v541, %v553
        %v564 = vmul.f32 %v542, %v553
        %v565 = vmul.f32 %v543, %v553
        %v566 = vmul.f32 %v544, %v553
        %v567 = vmul.f32 %v545, %v553
        %v568 = vmul.f32 %v546, %v553
        %v569 = vmul.f32 %v547, %v553
        %v570 = vmul.f32 %v548, %v553
        %v572 = vlaneseq
        %v573 = vshrl.u32 %v572, 7
        %v574 = vsub.s32 0, %v573
        %v575 = vrot.slane %v338, %v574
        %v577 = vadd.f32 %v555, %v575
        %v578 = vadd.f32 %v556, %v575
        %v579 = vadd.f32 %v557, %v575
        %v580 = vadd.f32 %v558, %v575
        %v581 = vadd.f32 %v559, %v575
        %v582 = vadd.f32 %v560, %v575
        %v583 = vadd.f32 %v561, %v575
        %v584 = vadd.f32 %v562, %v575
        %v585 = vadd.f32 %v563, %v575
        %v586 = vadd.f32 %v564, %v575
        %v587 = vadd.f32 %v565, %v575
        %v588 = vadd.f32 %v566, %v575
        %v589 = vadd.f32 %v567, %v575
        %v590 = vadd.f32 %v568, %v575
        %v591 = vadd.f32 %v569, %v575
        %v592 = vadd.f32 %v570, %v575
        %v593 = vpack.c.bf16 %v578, %v577
        %v594 = vpack.c.bf16 %v580, %v579
        %v595 = vpack.c.bf16 %v582, %v581
        %v596 = vpack.c.bf16 %v584, %v583
        %v597 = vpack.c.bf16 %v586, %v585
        %v598 = vpack.c.bf16 %v588, %v587
        %v599 = vpack.c.bf16 %v590, %v589
        %v600 = vpack.c.bf16 %v592, %v591
        %v601 = vld [vmem:[%s4] sm:$0xff]
        %v602 = vld [vmem:[%s4 + $0x8] sm:$0xff]
        %v603 = vld [vmem:[%s4 + $0x10] sm:$0xff]
        %v604 = vld [vmem:[%s4 + $0x18] sm:$0xff]
        %v605 = vld [vmem:[%s4 + $0x20] sm:$0xff]
        %v606 = vld [vmem:[%s4 + $0x28] sm:$0xff]
        %v607 = vld [vmem:[%s4 + $0x30] sm:$0xff]
        %v608 = vld [vmem:[%s4 + $0x38] sm:$0xff]
        %v609 = vld [vmem:[%s5] sm:$0xff]
        %v611 = vlaneseq
        %v612 = vshrl.u32 %v611, 7
        %v613 = vsub.s32 0, %v612
        %v614 = vrot.slane %v609, %v613
        %v615 = vlaneseq
        %v616 = vshrl.u32 %v615, 7
        %v617 = vsub.s32 1, %v616
        %v618 = vrot.slane %v609, %v617
        %v619 = vlaneseq
        %v620 = vshrl.u32 %v619, 7
        %v621 = vsub.s32 2, %v620
        %v622 = vrot.slane %v609, %v621
        %v623 = vlaneseq
        %v624 = vshrl.u32 %v623, 7
        %v625 = vsub.s32 3, %v624
        %v626 = vrot.slane %v609, %v625
        %v627 = vlaneseq
        %v628 = vshrl.u32 %v627, 7
        %v629 = vsub.s32 4, %v628
        %v630 = vrot.slane %v609, %v629
        %v631 = vlaneseq
        %v632 = vshrl.u32 %v631, 7
        %v633 = vsub.s32 5, %v632
        %v634 = vrot.slane %v609, %v633
        %v635 = vlaneseq
        %v636 = vshrl.u32 %v635, 7
        %v637 = vsub.s32 6, %v636
        %v638 = vrot.slane %v609, %v637
        %v639 = vlaneseq
        %v640 = vshrl.u32 %v639, 7
        %v641 = vsub.s32 7, %v640
        %v642 = vrot.slane %v609, %v641
        %v659 = vunpack.c.l.b16 %v601
        %v660 = vunpack.c.h.b16 %v601
        %v661 = vunpack.c.l.b16 %v602
        %v662 = vunpack.c.h.b16 %v602
        %v663 = vunpack.c.l.b16 %v603
        %v664 = vunpack.c.h.b16 %v603
        %v665 = vunpack.c.l.b16 %v604
        %v666 = vunpack.c.h.b16 %v604
        %v667 = vunpack.c.l.b16 %v605
        %v668 = vunpack.c.h.b16 %v605
        %v669 = vunpack.c.l.b16 %v606
        %v670 = vunpack.c.h.b16 %v606
        %v671 = vunpack.c.l.b16 %v607
        %v672 = vunpack.c.h.b16 %v607
        %v673 = vunpack.c.l.b16 %v608
        %v674 = vunpack.c.h.b16 %v608
        %v675 = vpack.c.b16 %v667, %v659
        %v676 = vpack.c.b16 %v668, %v660
        %v677 = vpack.c.b16 %v669, %v661
        %v678 = vpack.c.b16 %v670, %v662
        %v679 = vpack.c.b16 %v671, %v663
        %v680 = vpack.c.b16 %v672, %v664
        %v681 = vpack.c.b16 %v673, %v665
        %v682 = vpack.c.b16 %v674, %v666
        %v692 = vsel %vm339, %v593, 0
        %v695 = vsel %vm339, %v594, 0
        %v698 = vsel %vm339, %v595, 0
        %v701 = vsel %vm339, %v596, 0
        %v704 = vsel %vm339, %v597, 0
        %v707 = vsel %vm339, %v598, 0
        %v710 = vsel %vm339, %v599, 0
        %v713 = vsel %vm339, %v600, 0
        %715 = vmatprep.subr.bf16.mxu0 %v676
        %716 = vmatpush1.bf16.msra.mxu0 %v675
        %717 = vmatprep.subr.bf16.mxu0 0
        %718 = vmatpush1.bf16.msra.mxu0 0
        %719 = vmatprep.subr.bf16.mxu0 0
        %720 = vmatpush1.bf16.msra.mxu0 0
        %721 = vmatprep.subr.bf16.mxu0 0
        %722 = vmatpush1.bf16.msra.mxu0 0
        %723 = vmatprep.subr.bf16.mxu0 0
        %724 = vmatpush1.bf16.msra.mxu0 0
        %725 = vmatprep.subr.bf16.mxu0 0
        %726 = vmatpush1.bf16.msra.mxu0 0
        %727 = vmatprep.subr.bf16.mxu0 0
        %728 = vmatpush1.bf16.msra.mxu0 0
        %729 = vmatprep.subr.bf16.mxu0 0
        %730 = vmatpush1.bf16.msra.mxu0 0
        %731 = vmatprep.subr.bf16.mxu0 0
        %732 = vmatpush1.bf16.msra.mxu0 0
        %733 = vmatprep.subr.bf16.mxu0 0
        %734 = vmatpush1.bf16.msra.mxu0 0
        %735 = vmatprep.subr.bf16.mxu0 0
        %736 = vmatpush1.bf16.msra.mxu0 0
        %737 = vmatprep.subr.bf16.mxu0 0
        %738 = vmatpush1.bf16.msra.mxu0 0
        %739 = vmatprep.subr.bf16.mxu0 0
        %740 = vmatpush1.bf16.msra.mxu0 0
        %741 = vmatprep.subr.bf16.mxu0 0
        %742 = vmatpush1.bf16.msra.mxu0 0
        %743 = vmatprep.subr.bf16.mxu0 0
        %744 = vmatpush1.bf16.msra.mxu0 0
        %745 = vmatprep.subr.bf16.mxu0 0
        %746 = vmatpush1.bf16.msra.mxu0 0
        %747 = vmatprep.mubr.bf16.mxu0 0
        %748 = vmatmul.mubr.bf16.gmra.mrb[0].mxu0 %v692
        %v749 = vpop.f32.mrb[0].mxu0
        %v750 = vadd.f32 %v614, %v749
        %v751 = vpop.f32.mrb[0].mxu0
        %v752 = vadd.f32 %v618, %v751
        %v753 = vpop.f32.mrb[0].mxu0
        %v754 = vadd.f32 %v614, %v753
        %v755 = vpop.f32.mrb[0].mxu0
        %v756 = vadd.f32 %v618, %v755
        %757 = vmatprep.mubr.bf16.mxu0 0
        %758 = vmatmul.mubr.bf16.gmra.mrb[0].mxu0 %v695
        %v759 = vpop.f32.mrb[0].mxu0
        %v760 = vadd.f32 %v614, %v759
        %v761 = vpop.f32.mrb[0].mxu0
        %v762 = vadd.f32 %v618, %v761
        %v763 = vpop.f32.mrb[0].mxu0
        %v764 = vadd.f32 %v614, %v763
        %v765 = vpop.f32.mrb[0].mxu0
        %v766 = vadd.f32 %v618, %v765
        %767 = vmatprep.mubr.bf16.mxu0 0
        %768 = vmatmul.mubr.bf16.gmra.mrb[0].mxu0 %v698
        %v769 = vpop.f32.mrb[0].mxu0
        %v770 = vadd.f32 %v614, %v769
        %v771 = vpop.f32.mrb[0].mxu0
        %v772 = vadd.f32 %v618, %v771
        %v773 = vpop.f32.mrb[0].mxu0
        %v774 = vadd.f32 %v614, %v773
        %v775 = vpop.f32.mrb[0].mxu0
        %v776 = vadd.f32 %v618, %v775
        %777 = vmatprep.mubr.bf16.mxu0 0
        %778 = vmatmul.mubr.bf16.gmra.mrb[0].mxu0 %v701
        %v779 = vpop.f32.mrb[0].mxu0
        %v780 = vadd.f32 %v614, %v779
        %v781 = vpop.f32.mrb[0].mxu0
        %v782 = vadd.f32 %v618, %v781
        %v783 = vpop.f32.mrb[0].mxu0
        %v784 = vadd.f32 %v614, %v783
        %v785 = vpop.f32.mrb[0].mxu0
        %v786 = vadd.f32 %v618, %v785
        %787 = vmatprep.mubr.bf16.mxu0 0
        %788 = vmatmul.mubr.bf16.gmra.mrb[0].mxu0 %v704
        %v789 = vpop.f32.mrb[0].mxu0
        %v790 = vadd.f32 %v614, %v789
        %v791 = vpop.f32.mrb[0].mxu0
        %v792 = vadd.f32 %v618, %v791
        %v793 = vpop.f32.mrb[0].mxu0
        %v794 = vadd.f32 %v614, %v793
        %v795 = vpop.f32.mrb[0].mxu0
        %v796 = vadd.f32 %v618, %v795
        %797 = vmatprep.mubr.bf16.mxu0 0
        %798 = vmatmul.mubr.bf16.gmra.mrb[0].mxu0 %v707
        %v799 = vpop.f32.mrb[0].mxu0
        %v800 = vadd.f32 %v614, %v799
        %v801 = vpop.f32.mrb[0].mxu0
        %v802 = vadd.f32 %v618, %v801
        %v803 = vpop.f32.mrb[0].mxu0
        %v804 = vadd.f32 %v614, %v803
        %v805 = vpop.f32.mrb[0].mxu0
        %v806 = vadd.f32 %v618, %v805
        %807 = vmatprep.mubr.bf16.mxu0 0
        %808 = vmatmul.mubr.bf16.gmra.mrb[0].mxu0 %v710
        %v809 = vpop.f32.mrb[0].mxu0
        %v810 = vadd.f32 %v614, %v809
        %v811 = vpop.f32.mrb[0].mxu0
        %v812 = vadd.f32 %v618, %v811
        %v813 = vpop.f32.mrb[0].mxu0
        %v814 = vadd.f32 %v614, %v813
        %v815 = vpop.f32.mrb[0].mxu0
        %v816 = vadd.f32 %v618, %v815
        %817 = vmatprep.mubr.bf16.mxu0 0
        %818 = vmatmul.mubr.bf16.gmra.mrb[0].mxu0 %v713
        %v819 = vpop.f32.mrb[0].mxu0
        %v820 = vadd.f32 %v614, %v819
        %v821 = vpop.f32.mrb[0].mxu0
        %v822 = vadd.f32 %v618, %v821
        %v823 = vpop.f32.mrb[0].mxu0
        %v824 = vadd.f32 %v614, %v823
        %v825 = vpop.f32.mrb[0].mxu0
        %v826 = vadd.f32 %v618, %v825
        %827 = vdwg.mxu0
        %828 = vmatprep.subr.bf16.mxu0 %v678
        %829 = vmatpush1.bf16.msra.mxu0 %v677
        %830 = vmatprep.subr.bf16.mxu0 0
        %831 = vmatpush1.bf16.msra.mxu0 0
        %832 = vmatprep.subr.bf16.mxu0 0
        %833 = vmatpush1.bf16.msra.mxu0 0
        %834 = vmatprep.subr.bf16.mxu0 0
        %835 = vmatpush1.bf16.msra.mxu0 0
        %836 = vmatprep.subr.bf16.mxu0 0
        %837 = vmatpush1.bf16.msra.mxu0 0
        %838 = vmatprep.subr.bf16.mxu0 0
        %839 = vmatpush1.bf16.msra.mxu0 0
        %840 = vmatprep.subr.bf16.mxu0 0
        %841 = vmatpush1.bf16.msra.mxu0 0
        %842 = vmatprep.subr.bf16.mxu0 0
        %843 = vmatpush1.bf16.msra.mxu0 0
        %844 = vmatprep.subr.bf16.mxu0 0
        %845 = vmatpush1.bf16.msra.mxu0 0
        %846 = vmatprep.subr.bf16.mxu0 0
        %847 = vmatpush1.bf16.msra.mxu0 0
        %848 = vmatprep.subr.bf16.mxu0 0
        %849 = vmatpush1.bf16.msra.mxu0 0
        %850 = vmatprep.subr.bf16.mxu0 0
        %851 = vmatpush1.bf16.msra.mxu0 0
        %852 = vmatprep.subr.bf16.mxu0 0
        %853 = vmatpush1.bf16.msra.mxu0 0
        %854 = vmatprep.subr.bf16.mxu0 0
        %855 = vmatpush1.bf16.msra.mxu0 0
        %856 = vmatprep.subr.bf16.mxu0 0
        %857 = vmatpush1.bf16.msra.mxu0 0
        %858 = vmatprep.subr.bf16.mxu0 0
        %859 = vmatpush1.bf16.msra.mxu0 0
        %860 = vmatprep.mubr.bf16.mxu0 0
        %861 = vmatmul.mubr.bf16.gmra.mrb[0].mxu0 %v692
        %v862 = vpop.f32.mrb[0].mxu0
        %v863 = vadd.f32 %v622, %v862
        %v864 = vpop.f32.mrb[0].mxu0
        %v865 = vadd.f32 %v626, %v864
        %v866 = vpop.f32.mrb[0].mxu0
        %v867 = vadd.f32 %v622, %v866
        %v868 = vpop.f32.mrb[0].mxu0
        %v869 = vadd.f32 %v626, %v868
        %870 = vmatprep.mubr.bf16.mxu0 0
        %871 = vmatmul.mubr.bf16.gmra.mrb[0].mxu0 %v695
        %v872 = vpop.f32.mrb[0].mxu0
        %v873 = vadd.f32 %v622, %v872
        %v874 = vpop.f32.mrb[0].mxu0
        %v875 = vadd.f32 %v626, %v874
        %v876 = vpop.f32.mrb[0].mxu0
        %v877 = vadd.f32 %v622, %v876
        %v878 = vpop.f32.mrb[0].mxu0
        %v879 = vadd.f32 %v626, %v878
        %880 = vmatprep.mubr.bf16.mxu0 0
        %881 = vmatmul.mubr.bf16.gmra.mrb[0].mxu0 %v698
        %v882 = vpop.f32.mrb[0].mxu0
        %v883 = vadd.f32 %v622, %v882
        %v884 = vpop.f32.mrb[0].mxu0
        %v885 = vadd.f32 %v626, %v884
        %v886 = vpop.f32.mrb[0].mxu0
        %v887 = vadd.f32 %v622, %v886
        %v888 = vpop.f32.mrb[0].mxu0
        %v889 = vadd.f32 %v626, %v888
        %890 = vmatprep.mubr.bf16.mxu0 0
        %891 = vmatmul.mubr.bf16.gmra.mrb[0].mxu0 %v701
        %v892 = vpop.f32.mrb[0].mxu0
        %v893 = vadd.f32 %v622, %v892
        %v894 = vpop.f32.mrb[0].mxu0
        %v895 = vadd.f32 %v626, %v894
        %v896 = vpop.f32.mrb[0].mxu0
        %v897 = vadd.f32 %v622, %v896
        %v898 = vpop.f32.mrb[0].mxu0
        %v899 = vadd.f32 %v626, %v898
        %900 = vmatprep.mubr.bf16.mxu0 0
        %901 = vmatmul.mubr.bf16.gmra.mrb[0].mxu0 %v704
        %v902 = vpop.f32.mrb[0].mxu0
        %v903 = vadd.f32 %v622, %v902
        %v904 = vpop.f32.mrb[0].mxu0
        %v905 = vadd.f32 %v626, %v904
        %v906 = vpop.f32.mrb[0].mxu0
        %v907 = vadd.f32 %v622, %v906
        %v908 = vpop.f32.mrb[0].mxu0
        %v909 = vadd.f32 %v626, %v908
        %910 = vmatprep.mubr.bf16.mxu0 0
        %911 = vmatmul.mubr.bf16.gmra.mrb[0].mxu0 %v707
        %v912 = vpop.f32.mrb[0].mxu0
        %v913 = vadd.f32 %v622, %v912
        %v914 = vpop.f32.mrb[0].mxu0
        %v915 = vadd.f32 %v626, %v914
        %v916 = vpop.f32.mrb[0].mxu0
        %v917 = vadd.f32 %v622, %v916
        %v918 = vpop.f32.mrb[0].mxu0
        %v919 = vadd.f32 %v626, %v918
        %920 = vmatprep.mubr.bf16.mxu0 0
        %921 = vmatmul.mubr.bf16.gmra.mrb[0].mxu0 %v710
        %v922 = vpop.f32.mrb[0].mxu0
        %v923 = vadd.f32 %v622, %v922
        %v924 = vpop.f32.mrb[0].mxu0
        %v925 = vadd.f32 %v626, %v924
        %v926 = vpop.f32.mrb[0].mxu0
        %v927 = vadd.f32 %v622, %v926
        %v928 = vpop.f32.mrb[0].mxu0
        %v929 = vadd.f32 %v626, %v928
        %930 = vmatprep.mubr.bf16.mxu0 0
        %931 = vmatmul.mubr.bf16.gmra.mrb[0].mxu0 %v713
        %v932 = vpop.f32.mrb[0].mxu0
        %v933 = vadd.f32 %v622, %v932
        %v934 = vpop.f32.mrb[0].mxu0
        %v935 = vadd.f32 %v626, %v934
        %v936 = vpop.f32.mrb[0].mxu0
        %v937 = vadd.f32 %v622, %v936
        %v938 = vpop.f32.mrb[0].mxu0
        %v939 = vadd.f32 %v626, %v938
        %940 = vdwg.mxu0
        %941 = vmatprep.subr.bf16.mxu0 %v680
        %942 = vmatpush1.bf16.msra.mxu0 %v679
        %943 = vmatprep.subr.bf16.mxu0 0
        %944 = vmatpush1.bf16.msra.mxu0 0
        %945 = vmatprep.subr.bf16.mxu0 0
        %946 = vmatpush1.bf16.msra.mxu0 0
        %947 = vmatprep.subr.bf16.mxu0 0
        %948 = vmatpush1.bf16.msra.mxu0 0
        %949 = vmatprep.subr.bf16.mxu0 0
        %950 = vmatpush1.bf16.msra.mxu0 0
        %951 = vmatprep.subr.bf16.mxu0 0
        %952 = vmatpush1.bf16.msra.mxu0 0
        %953 = vmatprep.subr.bf16.mxu0 0
        %954 = vmatpush1.bf16.msra.mxu0 0
        %955 = vmatprep.subr.bf16.mxu0 0
        %956 = vmatpush1.bf16.msra.mxu0 0
        %957 = vmatprep.subr.bf16.mxu0 0
        %958 = vmatpush1.bf16.msra.mxu0 0
        %959 = vmatprep.subr.bf16.mxu0 0
        %960 = vmatpush1.bf16.msra.mxu0 0
        %961 = vmatprep.subr.bf16.mxu0 0
        %962 = vmatpush1.bf16.msra.mxu0 0
        %963 = vmatprep.subr.bf16.mxu0 0
        %964 = vmatpush1.bf16.msra.mxu0 0
        %965 = vmatprep.subr.bf16.mxu0 0
        %966 = vmatpush1.bf16.msra.mxu0 0
        %967 = vmatprep.subr.bf16.mxu0 0
        %968 = vmatpush1.bf16.msra.mxu0 0
        %969 = vmatprep.subr.bf16.mxu0 0
        %970 = vmatpush1.bf16.msra.mxu0 0
        %971 = vmatprep.subr.bf16.mxu0 0
        %972 = vmatpush1.bf16.msra.mxu0 0
        %973 = vmatprep.mubr.bf16.mxu0 0
        %974 = vmatmul.mubr.bf16.gmra.mrb[0].mxu0 %v692
        %v975 = vpop.f32.mrb[0].mxu0
        %v976 = vadd.f32 %v630, %v975
        %v977 = vpop.f32.mrb[0].mxu0
        %v978 = vadd.f32 %v634, %v977
        %v979 = vpop.f32.mrb[0].mxu0
        %v980 = vadd.f32 %v630, %v979
        %v981 = vpop.f32.mrb[0].mxu0
        %v982 = vadd.f32 %v634, %v981
        %983 = vmatprep.mubr.bf16.mxu0 0
        %984 = vmatmul.mubr.bf16.gmra.mrb[0].mxu0 %v695
        %v985 = vpop.f32.mrb[0].mxu0
        %v986 = vadd.f32 %v630, %v985
        %v987 = vpop.f32.mrb[0].mxu0
        %v988 = vadd.f32 %v634, %v987
        %v989 = vpop.f32.mrb[0].mxu0
        %v990 = vadd.f32 %v630, %v989
        %v991 = vpop.f32.mrb[0].mxu0
        %v992 = vadd.f32 %v634, %v991
        %993 = vmatprep.mubr.bf16.mxu0 0
        %994 = vmatmul.mubr.bf16.gmra.mrb[0].mxu0 %v698
        %v995 = vpop.f32.mrb[0].mxu0
        %v996 = vadd.f32 %v630, %v995
        %v997 = vpop.f32.mrb[0].mxu0
        %v998 = vadd.f32 %v634, %v997
        %v999 = vpop.f32.mrb[0].mxu0
        %v1000 = vadd.f32 %v630, %v999
        %v1001 = vpop.f32.mrb[0].mxu0
        %v1002 = vadd.f32 %v634, %v1001
        %1003 = vmatprep.mubr.bf16.mxu0 0
        %1004 = vmatmul.mubr.bf16.gmra.mrb[0].mxu0 %v701
        %v1005 = vpop.f32.mrb[0].mxu0
        %v1006 = vadd.f32 %v630, %v1005
        %v1007 = vpop.f32.mrb[0].mxu0
        %v1008 = vadd.f32 %v634, %v1007
        %v1009 = vpop.f32.mrb[0].mxu0
        %v1010 = vadd.f32 %v630, %v1009
        %v1011 = vpop.f32.mrb[0].mxu0
        %v1012 = vadd.f32 %v634, %v1011
        %1013 = vmatprep.mubr.bf16.mxu0 0
        %1014 = vmatmul.mubr.bf16.gmra.mrb[0].mxu0 %v704
        %v1015 = vpop.f32.mrb[0].mxu0
        %v1016 = vadd.f32 %v630, %v1015
        %v1017 = vpop.f32.mrb[0].mxu0
        %v1018 = vadd.f32 %v634, %v1017
        %v1019 = vpop.f32.mrb[0].mxu0
        %v1020 = vadd.f32 %v630, %v1019
        %v1021 = vpop.f32.mrb[0].mxu0
        %v1022 = vadd.f32 %v634, %v1021
        %1023 = vmatprep.mubr.bf16.mxu0 0
        %1024 = vmatmul.mubr.bf16.gmra.mrb[0].mxu0 %v707
        %v1025 = vpop.f32.mrb[0].mxu0
        %v1026 = vadd.f32 %v630, %v1025
        %v1027 = vpop.f32.mrb[0].mxu0
        %v1028 = vadd.f32 %v634, %v1027
        %v1029 = vpop.f32.mrb[0].mxu0
        %v1030 = vadd.f32 %v630, %v1029
        %v1031 = vpop.f32.mrb[0].mxu0
        %v1032 = vadd.f32 %v634, %v1031
        %1033 = vmatprep.mubr.bf16.mxu0 0
        %1034 = vmatmul.mubr.bf16.gmra.mrb[0].mxu0 %v710
        %v1035 = vpop.f32.mrb[0].mxu0
        %v1036 = vadd.f32 %v630, %v1035
        %v1037 = vpop.f32.mrb[0].mxu0
        %v1038 = vadd.f32 %v634, %v1037
        %v1039 = vpop.f32.mrb[0].mxu0
        %v1040 = vadd.f32 %v630, %v1039
        %v1041 = vpop.f32.mrb[0].mxu0
        %v1042 = vadd.f32 %v634, %v1041
        %1043 = vmatprep.mubr.bf16.mxu0 0
        %1044 = vmatmul.mubr.bf16.gmra.mrb[0].mxu0 %v713
        %v1045 = vpop.f32.mrb[0].mxu0
        %v1046 = vadd.f32 %v630, %v1045
        %v1047 = vpop.f32.mrb[0].mxu0
        %v1048 = vadd.f32 %v634, %v1047
        %v1049 = vpop.f32.mrb[0].mxu0
        %v1050 = vadd.f32 %v630, %v1049
        %v1051 = vpop.f32.mrb[0].mxu0
        %v1052 = vadd.f32 %v634, %v1051
        %1053 = vdwg.mxu0
        %1054 = vmatprep.subr.bf16.mxu0 %v682
        %1055 = vmatpush1.bf16.msra.mxu0 %v681
        %1056 = vmatprep.subr.bf16.mxu0 0
        %1057 = vmatpush1.bf16.msra.mxu0 0
        %1058 = vmatprep.subr.bf16.mxu0 0
        %1059 = vmatpush1.bf16.msra.mxu0 0
        %1060 = vmatprep.subr.bf16.mxu0 0
        %1061 = vmatpush1.bf16.msra.mxu0 0
        %1062 = vmatprep.subr.bf16.mxu0 0
        %1063 = vmatpush1.bf16.msra.mxu0 0
        %1064 = vmatprep.subr.bf16.mxu0 0
        %1065 = vmatpush1.bf16.msra.mxu0 0
        %1066 = vmatprep.subr.bf16.mxu0 0
        %1067 = vmatpush1.bf16.msra.mxu0 0
        %1068 = vmatprep.subr.bf16.mxu0 0
        %1069 = vmatpush1.bf16.msra.mxu0 0
        %1070 = vmatprep.subr.bf16.mxu0 0
        %1071 = vmatpush1.bf16.msra.mxu0 0
        %1072 = vmatprep.subr.bf16.mxu0 0
        %1073 = vmatpush1.bf16.msra.mxu0 0
        %1074 = vmatprep.subr.bf16.mxu0 0
        %1075 = vmatpush1.bf16.msra.mxu0 0
        %1076 = vmatprep.subr.bf16.mxu0 0
        %1077 = vmatpush1.bf16.msra.mxu0 0
        %1078 = vmatprep.subr.bf16.mxu0 0
        %1079 = vmatpush1.bf16.msra.mxu0 0
        %1080 = vmatprep.subr.bf16.mxu0 0
        %1081 = vmatpush1.bf16.msra.mxu0 0
        %1082 = vmatprep.subr.bf16.mxu0 0
        %1083 = vmatpush1.bf16.msra.mxu0 0
        %1084 = vmatprep.subr.bf16.mxu0 0
        %1085 = vmatpush1.bf16.msra.mxu0 0
        %1086 = vmatprep.mubr.bf16.mxu0 0
        %1087 = vmatmul.mubr.bf16.gmra.mrb[0].mxu0 %v692
        %v1088 = vpop.f32.mrb[0].mxu0
        %v1089 = vadd.f32 %v638, %v1088
        %v1090 = vpop.f32.mrb[0].mxu0
        %v1091 = vadd.f32 %v642, %v1090
        %v1092 = vpop.f32.mrb[0].mxu0
        %v1093 = vadd.f32 %v638, %v1092
        %v1094 = vpop.f32.mrb[0].mxu0
        %v1095 = vadd.f32 %v642, %v1094
        %1096 = vmatprep.mubr.bf16.mxu0 0
        %1097 = vmatmul.mubr.bf16.gmra.mrb[0].mxu0 %v695
        %v1098 = vpop.f32.mrb[0].mxu0
        %v1099 = vadd.f32 %v638, %v1098
        %v1100 = vpop.f32.mrb[0].mxu0
        %v1101 = vadd.f32 %v642, %v1100
        %v1102 = vpop.f32.mrb[0].mxu0
        %v1103 = vadd.f32 %v638, %v1102
        %v1104 = vpop.f32.mrb[0].mxu0
        %v1105 = vadd.f32 %v642, %v1104
        %1106 = vmatprep.mubr.bf16.mxu0 0
        %1107 = vmatmul.mubr.bf16.gmra.mrb[0].mxu0 %v698
        %v1108 = vpop.f32.mrb[0].mxu0
        %v1109 = vadd.f32 %v638, %v1108
        %v1110 = vpop.f32.mrb[0].mxu0
        %v1111 = vadd.f32 %v642, %v1110
        %v1112 = vpop.f32.mrb[0].mxu0
        %v1113 = vadd.f32 %v638, %v1112
        %v1114 = vpop.f32.mrb[0].mxu0
        %v1115 = vadd.f32 %v642, %v1114
        %1116 = vmatprep.mubr.bf16.mxu0 0
        %1117 = vmatmul.mubr.bf16.gmra.mrb[0].mxu0 %v701
        %v1118 = vpop.f32.mrb[0].mxu0
        %v1119 = vadd.f32 %v638, %v1118
        %v1120 = vpop.f32.mrb[0].mxu0
        %v1121 = vadd.f32 %v642, %v1120
        %v1122 = vpop.f32.mrb[0].mxu0
        %v1123 = vadd.f32 %v638, %v1122
        %v1124 = vpop.f32.mrb[0].mxu0
        %v1125 = vadd.f32 %v642, %v1124
        %1126 = vmatprep.mubr.bf16.mxu0 0
        %1127 = vmatmul.mubr.bf16.gmra.mrb[0].mxu0 %v704
        %v1128 = vpop.f32.mrb[0].mxu0
        %v1129 = vadd.f32 %v638, %v1128
        %v1130 = vpop.f32.mrb[0].mxu0
        %v1131 = vadd.f32 %v642, %v1130
        %v1132 = vpop.f32.mrb[0].mxu0
        %v1133 = vadd.f32 %v638, %v1132
        %v1134 = vpop.f32.mrb[0].mxu0
        %v1135 = vadd.f32 %v642, %v1134
        %1136 = vmatprep.mubr.bf16.mxu0 0
        %1137 = vmatmul.mubr.bf16.gmra.mrb[0].mxu0 %v707
        %v1138 = vpop.f32.mrb[0].mxu0
        %v1139 = vadd.f32 %v638, %v1138
        %v1140 = vpop.f32.mrb[0].mxu0
        %v1141 = vadd.f32 %v642, %v1140
        %v1142 = vpop.f32.mrb[0].mxu0
        %v1143 = vadd.f32 %v638, %v1142
        %v1144 = vpop.f32.mrb[0].mxu0
        %v1145 = vadd.f32 %v642, %v1144
        %1146 = vmatprep.mubr.bf16.mxu0 0
        %1147 = vmatmul.mubr.bf16.gmra.mrb[0].mxu0 %v710
        %v1148 = vpop.f32.mrb[0].mxu0
        %v1149 = vadd.f32 %v638, %v1148
        %v1150 = vpop.f32.mrb[0].mxu0
        %v1151 = vadd.f32 %v642, %v1150
        %v1152 = vpop.f32.mrb[0].mxu0
        %v1153 = vadd.f32 %v638, %v1152
        %v1154 = vpop.f32.mrb[0].mxu0
        %v1155 = vadd.f32 %v642, %v1154
        %1156 = vmatprep.mubr.bf16.mxu0 0
        %1157 = vmatmul.mubr.bf16.gmra.mrb[0].mxu0 %v713
        %v1158 = vpop.f32.mrb[0].mxu0
        %v1159 = vadd.f32 %v638, %v1158
        %v1160 = vpop.f32.mrb[0].mxu0
        %v1161 = vadd.f32 %v642, %v1160
        %v1162 = vpop.f32.mrb[0].mxu0
        %v1163 = vadd.f32 %v638, %v1162
        %v1164 = vpop.f32.mrb[0].mxu0
        %v1165 = vadd.f32 %v642, %v1164
        %1166 = vdwg.mxu0
        %v1167 = vpack.c.bf16 %v754, %v750
        %v1168 = vpack.c.bf16 %v756, %v752
        %v1169 = vpack.c.bf16 %v867, %v863
        %v1170 = vpack.c.bf16 %v869, %v865
        %v1171 = vpack.c.bf16 %v980, %v976
        %v1172 = vpack.c.bf16 %v982, %v978
        %v1173 = vpack.c.bf16 %v1093, %v1089
        %v1174 = vpack.c.bf16 %v1095, %v1091
        %v1175 = vpack.c.bf16 %v764, %v760
        %v1176 = vpack.c.bf16 %v766, %v762
        %v1177 = vpack.c.bf16 %v877, %v873
        %v1178 = vpack.c.bf16 %v879, %v875
        %v1179 = vpack.c.bf16 %v990, %v986
        %v1180 = vpack.c.bf16 %v992, %v988
        %v1181 = vpack.c.bf16 %v1103, %v1099
        %v1182 = vpack.c.bf16 %v1105, %v1101
        %v1183 = vpack.c.bf16 %v774, %v770
        %v1184 = vpack.c.bf16 %v776, %v772
        %v1185 = vpack.c.bf16 %v887, %v883
        %v1186 = vpack.c.bf16 %v889, %v885
        %v1187 = vpack.c.bf16 %v1000, %v996
        %v1188 = vpack.c.bf16 %v1002, %v998
        %v1189 = vpack.c.bf16 %v1113, %v1109
        %v1190 = vpack.c.bf16 %v1115, %v1111
        %v1191 = vpack.c.bf16 %v784, %v780
        %v1192 = vpack.c.bf16 %v786, %v782
        %v1193 = vpack.c.bf16 %v897, %v893
        %v1194 = vpack.c.bf16 %v899, %v895
        %v1195 = vpack.c.bf16 %v1010, %v1006
        %v1196 = vpack.c.bf16 %v1012, %v1008
        %v1197 = vpack.c.bf16 %v1123, %v1119
        %v1198 = vpack.c.bf16 %v1125, %v1121
        %v1199 = vpack.c.bf16 %v794, %v790
        %v1200 = vpack.c.bf16 %v796, %v792
        %v1201 = vpack.c.bf16 %v907, %v903
        %v1202 = vpack.c.bf16 %v909, %v905
        %v1203 = vpack.c.bf16 %v1020, %v1016
        %v1204 = vpack.c.bf16 %v1022, %v1018
        %v1205 = vpack.c.bf16 %v1133, %v1129
        %v1206 = vpack.c.bf16 %v1135, %v1131
        %v1207 = vpack.c.bf16 %v804, %v800
        %v1208 = vpack.c.bf16 %v806, %v802
        %v1209 = vpack.c.bf16 %v917, %v913
        %v1210 = vpack.c.bf16 %v919, %v915
        %v1211 = vpack.c.bf16 %v1030, %v1026
        %v1212 = vpack.c.bf16 %v1032, %v1028
        %v1213 = vpack.c.bf16 %v1143, %v1139
        %v1214 = vpack.c.bf16 %v1145, %v1141
        %v1215 = vpack.c.bf16 %v814, %v810
        %v1216 = vpack.c.bf16 %v816, %v812
        %v1217 = vpack.c.bf16 %v927, %v923
        %v1218 = vpack.c.bf16 %v929, %v925
        %v1219 = vpack.c.bf16 %v1040, %v1036
        %v1220 = vpack.c.bf16 %v1042, %v1038
        %v1221 = vpack.c.bf16 %v1153, %v1149
        %v1222 = vpack.c.bf16 %v1155, %v1151
        %v1223 = vpack.c.bf16 %v824, %v820
        %v1224 = vpack.c.bf16 %v826, %v822
        %v1225 = vpack.c.bf16 %v937, %v933
        %v1226 = vpack.c.bf16 %v939, %v935
        %v1227 = vpack.c.bf16 %v1050, %v1046
        %v1228 = vpack.c.bf16 %v1052, %v1048
        %v1229 = vpack.c.bf16 %v1163, %v1159
        %v1230 = vpack.c.bf16 %v1165, %v1161
        %v1231 = vld [vmem:[%s1] sm:$0xf]
        %v1232 = vld [vmem:[%s1 + $0x4] sm:$0xf]
        %v1233 = vld [vmem:[%s1 + $0x8] sm:$0xf]
        %v1234 = vld [vmem:[%s1 + $0xc] sm:$0xf]
        %v1235 = vlaneseq
        %v1236 = vand.u32 %v1235, 127
        %vm1237 = vcmp.lt.s32.totalorder %v1236, 8
        %v1238 = vsel %vm1237, 0.0, -1e+30
        %1239 = vmatprep.subr.bf16.mxu0 0
        %1240 = vmatpush1.bf16.xpose.msra.mxu0 %v1167
        %1241 = vmatprep.subr.bf16.mxu0 0
        %1242 = vmatpush1.bf16.xpose.msra.mxu0 %v1175
        %1243 = vmatprep.subr.bf16.mxu0 0
        %1244 = vmatpush1.bf16.xpose.msra.mxu0 %v1183
        %1245 = vmatprep.subr.bf16.mxu0 0
        %1246 = vmatpush1.bf16.xpose.msra.mxu0 %v1191
        %1247 = vmatprep.subr.bf16.mxu0 0
        %1248 = vmatpush1.bf16.xpose.msra.mxu0 %v1199
        %1249 = vmatprep.subr.bf16.mxu0 0
        %1250 = vmatpush1.bf16.xpose.msra.mxu0 %v1207
        %1251 = vmatprep.subr.bf16.mxu0 0
        %1252 = vmatpush1.bf16.xpose.msra.mxu0 %v1215
        %1253 = vmatprep.subr.bf16.mxu0 0
        %1254 = vmatpush1.bf16.xpose.msra.mxu0 %v1223
        %1255 = vmatprep.subr.bf16.mxu0 0
        %1256 = vmatpush1.bf16.xpose.msra.mxu0 0
        %1257 = vmatprep.subr.bf16.mxu0 0
        %1258 = vmatpush1.bf16.xpose.msra.mxu0 0
        %1259 = vmatprep.subr.bf16.mxu0 0
        %1260 = vmatpush1.bf16.xpose.msra.mxu0 0
        %1261 = vmatprep.subr.bf16.mxu0 0
        %1262 = vmatpush1.bf16.xpose.msra.mxu0 0
        %1263 = vmatprep.subr.bf16.mxu0 0
        %1264 = vmatpush1.bf16.xpose.msra.mxu0 0
        %1265 = vmatprep.subr.bf16.mxu0 0
        %1266 = vmatpush1.bf16.xpose.msra.mxu0 0
        %1267 = vmatprep.subr.bf16.mxu0 0
        %1268 = vmatpush1.bf16.xpose.msra.mxu0 0
        %1269 = vmatprep.subr.bf16.mxu0 0
        %1270 = vmatpush1.bf16.xpose.msra.mxu0 0
        %1271 = vmatprep.mubr.bf16.mxu0 0
        %1272 = vmatmul.mubr.bf16.gmra.mrb[0].mxu0 %v1231
        %v1273 = vpop.f32.mrb[0].mxu0
        %v1274 = vadd.f32 0.0, %v1273
        %v1275 = vpop.f32.mrb[0].mxu0
        %v1276 = vpop.f32.mrb[0].mxu0
        %v1277 = vpop.f32.mrb[0].mxu0
        %1278 = vdwg.mxu0
        %1279 = vst [vmem:[#allocation2] sm:$0xff] %v1274
        %1280 = vmatprep.subr.bf16.mxu0 0
        %1281 = vmatpush1.bf16.xpose.msra.mxu0 %v1168
        %1282 = vmatprep.subr.bf16.mxu0 0
        %1283 = vmatpush1.bf16.xpose.msra.mxu0 %v1176
        %1284 = vmatprep.subr.bf16.mxu0 0
        %1285 = vmatpush1.bf16.xpose.msra.mxu0 %v1184
        %1286 = vmatprep.subr.bf16.mxu0 0
        %1287 = vmatpush1.bf16.xpose.msra.mxu0 %v1192
        %1288 = vmatprep.subr.bf16.mxu0 0
        %1289 = vmatpush1.bf16.xpose.msra.mxu0 %v1200
        %1290 = vmatprep.subr.bf16.mxu0 0
        %1291 = vmatpush1.bf16.xpose.msra.mxu0 %v1208
        %1292 = vmatprep.subr.bf16.mxu0 0
        %1293 = vmatpush1.bf16.xpose.msra.mxu0 %v1216
        %1294 = vmatprep.subr.bf16.mxu0 0
        %1295 = vmatpush1.bf16.xpose.msra.mxu0 %v1224
        %1296 = vmatprep.subr.bf16.mxu0 0
        %1297 = vmatpush1.bf16.xpose.msra.mxu0 0
        %1298 = vmatprep.subr.bf16.mxu0 0
        %1299 = vmatpush1.bf16.xpose.msra.mxu0 0
        %1300 = vmatprep.subr.bf16.mxu0 0
        %1301 = vmatpush1.bf16.xpose.msra.mxu0 0
        %1302 = vmatprep.subr.bf16.mxu0 0
        %1303 = vmatpush1.bf16.xpose.msra.mxu0 0
        %1304 = vmatprep.subr.bf16.mxu0 0
        %1305 = vmatpush1.bf16.xpose.msra.mxu0 0
        %1306 = vmatprep.subr.bf16.mxu0 0
        %1307 = vmatpush1.bf16.xpose.msra.mxu0 0
        %1308 = vmatprep.subr.bf16.mxu0 0
        %1309 = vmatpush1.bf16.xpose.msra.mxu0 0
        %1310 = vmatprep.subr.bf16.mxu0 0
        %1311 = vmatpush1.bf16.xpose.msra.mxu0 0
        %1312 = vmatprep.mubr.bf16.mxu0 0
        %1313 = vmatmul.mubr.bf16.gmra.mrb[0].mxu0 %v1232
        %v1314 = vpop.f32.mrb[0].mxu0
        %v1315 = vadd.f32 0.0, %v1314
        %v1316 = vpop.f32.mrb[0].mxu0
        %v1317 = vpop.f32.mrb[0].mxu0
        %v1318 = vpop.f32.mrb[0].mxu0
        %1319 = vdwg.mxu0
        %1320 = vst [vmem:[#allocation2 + $0x8] sm:$0xff] %v1315
        %1321 = vmatprep.subr.bf16.mxu0 0
        %1322 = vmatpush1.bf16.xpose.msra.mxu0 %v1169
        %1323 = vmatprep.subr.bf16.mxu0 0
        %1324 = vmatpush1.bf16.xpose.msra.mxu0 %v1177
        %1325 = vmatprep.subr.bf16.mxu0 0
        %1326 = vmatpush1.bf16.xpose.msra.mxu0 %v1185
        %1327 = vmatprep.subr.bf16.mxu0 0
        %1328 = vmatpush1.bf16.xpose.msra.mxu0 %v1193
        %1329 = vmatprep.subr.bf16.mxu0 0
        %1330 = vmatpush1.bf16.xpose.msra.mxu0 %v1201
        %1331 = vmatprep.subr.bf16.mxu0 0
        %1332 = vmatpush1.bf16.xpose.msra.mxu0 %v1209
        %1333 = vmatprep.subr.bf16.mxu0 0
        %1334 = vmatpush1.bf16.xpose.msra.mxu0 %v1217
        %1335 = vmatprep.subr.bf16.mxu0 0
        %1336 = vmatpush1.bf16.xpose.msra.mxu0 %v1225
        %1337 = vmatprep.subr.bf16.mxu0 0
        %1338 = vmatpush1.bf16.xpose.msra.mxu0 0
        %1339 = vmatprep.subr.bf16.mxu0 0
        %1340 = vmatpush1.bf16.xpose.msra.mxu0 0
        %1341 = vmatprep.subr.bf16.mxu0 0
        %1342 = vmatpush1.bf16.xpose.msra.mxu0 0
        %1343 = vmatprep.subr.bf16.mxu0 0
        %1344 = vmatpush1.bf16.xpose.msra.mxu0 0
        %1345 = vmatprep.subr.bf16.mxu0 0
        %1346 = vmatpush1.bf16.xpose.msra.mxu0 0
        %1347 = vmatprep.subr.bf16.mxu0 0
        %1348 = vmatpush1.bf16.xpose.msra.mxu0 0
        %1349 = vmatprep.subr.bf16.mxu0 0
        %1350 = vmatpush1.bf16.xpose.msra.mxu0 0
        %1351 = vmatprep.subr.bf16.mxu0 0
        %1352 = vmatpush1.bf16.xpose.msra.mxu0 0
        %1353 = vmatprep.mubr.bf16.mxu0 0
        %1354 = vmatmul.mubr.bf16.gmra.mrb[0].mxu0 %v1233
        %v1355 = vpop.f32.mrb[0].mxu0
        %v1356 = vadd.f32 0.0, %v1355
        %v1357 = vpop.f32.mrb[0].mxu0
        %v1358 = vpop.f32.mrb[0].mxu0
        %v1359 = vpop.f32.mrb[0].mxu0
        %1360 = vdwg.mxu0
        %1361 = vst [vmem:[#allocation2 + $0x10] sm:$0xff] %v1356
        %1362 = vmatprep.subr.bf16.mxu0 0
        %1363 = vmatpush1.bf16.xpose.msra.mxu0 %v1170
        %1364 = vmatprep.subr.bf16.mxu0 0
        %1365 = vmatpush1.bf16.xpose.msra.mxu0 %v1178
        %1366 = vmatprep.subr.bf16.mxu0 0
        %1367 = vmatpush1.bf16.xpose.msra.mxu0 %v1186
        %1368 = vmatprep.subr.bf16.mxu0 0
        %1369 = vmatpush1.bf16.xpose.msra.mxu0 %v1194
        %1370 = vmatprep.subr.bf16.mxu0 0
        %1371 = vmatpush1.bf16.xpose.msra.mxu0 %v1202
        %1372 = vmatprep.subr.bf16.mxu0 0
        %1373 = vmatpush1.bf16.xpose.msra.mxu0 %v1210
        %1374 = vmatprep.subr.bf16.mxu0 0
        %1375 = vmatpush1.bf16.xpose.msra.mxu0 %v1218
        %1376 = vmatprep.subr.bf16.mxu0 0
        %1377 = vmatpush1.bf16.xpose.msra.mxu0 %v1226
        %1378 = vmatprep.subr.bf16.mxu0 0
        %1379 = vmatpush1.bf16.xpose.msra.mxu0 0
        %1380 = vmatprep.subr.bf16.mxu0 0
        %1381 = vmatpush1.bf16.xpose.msra.mxu0 0
        %1382 = vmatprep.subr.bf16.mxu0 0
        %1383 = vmatpush1.bf16.xpose.msra.mxu0 0
        %1384 = vmatprep.subr.bf16.mxu0 0
        %1385 = vmatpush1.bf16.xpose.msra.mxu0 0
        %1386 = vmatprep.subr.bf16.mxu0 0
        %1387 = vmatpush1.bf16.xpose.msra.mxu0 0
        %1388 = vmatprep.subr.bf16.mxu0 0
        %1389 = vmatpush1.bf16.xpose.msra.mxu0 0
        %1390 = vmatprep.subr.bf16.mxu0 0
        %1391 = vmatpush1.bf16.xpose.msra.mxu0 0
        %1392 = vmatprep.subr.bf16.mxu0 0
        %1393 = vmatpush1.bf16.xpose.msra.mxu0 0
        %1394 = vmatprep.mubr.bf16.mxu0 0
        %1395 = vmatmul.mubr.bf16.gmra.mrb[0].mxu0 %v1234
        %v1396 = vpop.f32.mrb[0].mxu0
        %v1397 = vadd.f32 0.0, %v1396
        %v1398 = vpop.f32.mrb[0].mxu0
        %v1399 = vpop.f32.mrb[0].mxu0
        %v1400 = vpop.f32.mrb[0].mxu0
        %1401 = vdwg.mxu0
        %1402 = vst [vmem:[#allocation2 + $0x18] sm:$0xff] %v1397
        %v1403 = vld [vmem:[#allocation2] sm:$0xff]
        %v1404 = vld [vmem:[#allocation2 + $0x8] sm:$0xff]
        %v1405 = vld [vmem:[#allocation2 + $0x10] sm:$0xff]
        %v1406 = vld [vmem:[#allocation2 + $0x18] sm:$0xff]
        %v1407 = vadd.f32 %v1403, %v1238
        %v1408 = vadd.f32 %v1404, %v1238
        %v1409 = vadd.f32 %v1405, %v1238
        %v1410 = vadd.f32 %v1406, %v1238
        %1411 = vmax.xlane.f32.xlu0 %v1407
        %v1412 = vpop.xlane.xlu0 %1411
        %1413 = vmax.xlane.f32.xlu0 %v1408
        %v1414 = vpop.xlane.xlu0 %1413
        %1415 = vmax.xlane.f32.xlu0 %v1409
        %v1416 = vpop.xlane.xlu0 %1415
        %1417 = vmax.xlane.f32.xlu0 %v1410
        %v1418 = vpop.xlane.xlu0 %1417
        %v1419 = vsub.f32 %v1407, %v1412
        %v1420 = vsub.f32 %v1408, %v1414
        %v1421 = vsub.f32 %v1409, %v1416
        %v1422 = vsub.f32 %v1410, %v1418
        %v1423 = vmul.f32 %v1419, 1.442695
        %v1424 = vpow.pop %v1423
        %v1425 = vmul.f32 %v1420, 1.442695
        %v1426 = vpow.pop %v1425
        %v1427 = vmul.f32 %v1421, 1.442695
        %v1428 = vpow.pop %v1427
        %v1429 = vmul.f32 %v1422, 1.442695
        %v1430 = vpow.pop %v1429
        %1431 = vadd.xlane.f32.xlu0 %v1424
        %v1432 = vpop.xlane.xlu0 %1431
        %1433 = vadd.xlane.f32.xlu0 %v1426
        %v1434 = vpop.xlane.xlu0 %1433
        %1435 = vadd.xlane.f32.xlu0 %v1428
        %v1436 = vpop.xlane.xlu0 %1435
        %1437 = vadd.xlane.f32.xlu0 %v1430
        %v1438 = vpop.xlane.xlu0 %1437
        %v1439 = vrcp.pop %v1432
        %v1440 = vrcp.pop %v1434
        %v1441 = vrcp.pop %v1436
        %v1442 = vrcp.pop %v1438
        %v1443 = vmul.f32 %v1424, %v1439
        %v1444 = vmul.f32 %v1426, %v1440
        %v1445 = vmul.f32 %v1428, %v1441
        %v1446 = vmul.f32 %v1430, %v1442
        %v1447 = vpack.c.bf16 %v1444, %v1443
        %v1448 = vpack.c.bf16 %v1446, %v1445
        %1449 = vmatprep.subr.bf16.mxu0 0
        %1450 = vmatpush1.bf16.msra.mxu0 %v1171
        %1451 = vmatprep.subr.bf16.mxu0 0
        %1452 = vmatpush1.bf16.msra.mxu0 %v1179
        %1453 = vmatprep.subr.bf16.mxu0 0
        %1454 = vmatpush1.bf16.msra.mxu0 %v1187
        %1455 = vmatprep.subr.bf16.mxu0 0
        %1456 = vmatpush1.bf16.msra.mxu0 %v1195
        %1457 = vmatprep.subr.bf16.mxu0 0
        %1458 = vmatpush1.bf16.msra.mxu0 %v1203
        %1459 = vmatprep.subr.bf16.mxu0 0
        %1460 = vmatpush1.bf16.msra.mxu0 %v1211
        %1461 = vmatprep.subr.bf16.mxu0 0
        %1462 = vmatpush1.bf16.msra.mxu0 %v1219
        %1463 = vmatprep.subr.bf16.mxu0 0
        %1464 = vmatpush1.bf16.msra.mxu0 %v1227
        %1465 = vmatprep.subr.bf16.mxu0 0
        %1466 = vmatpush1.bf16.msra.mxu0 0
        %1467 = vmatprep.subr.bf16.mxu0 0
        %1468 = vmatpush1.bf16.msra.mxu0 0
        %1469 = vmatprep.subr.bf16.mxu0 0
        %1470 = vmatpush1.bf16.msra.mxu0 0
        %1471 = vmatprep.subr.bf16.mxu0 0
        %1472 = vmatpush1.bf16.msra.mxu0 0
        %1473 = vmatprep.subr.bf16.mxu0 0
        %1474 = vmatpush1.bf16.msra.mxu0 0
        %1475 = vmatprep.subr.bf16.mxu0 0
        %1476 = vmatpush1.bf16.msra.mxu0 0
        %1477 = vmatprep.subr.bf16.mxu0 0
        %1478 = vmatpush1.bf16.msra.mxu0 0
        %1479 = vmatprep.subr.bf16.mxu0 0
        %1480 = vmatpush1.bf16.msra.mxu0 0
        %1481 = vmatprep.mubr.bf16.mxu0 0
        %1482 = vmatmul.mubr.bf16.gmra.mrb[0].mxu0 %v1447
        %v1483 = vpop.f32.mrb[0].mxu0
        %v1484 = vadd.f32 0.0, %v1483
        %v1485 = vpop.f32.mrb[0].mxu0
        %v1486 = vpop.f32.mrb[0].mxu0
        %v1487 = vpop.f32.mrb[0].mxu0
        %1488 = vdwg.mxu0
        %1489 = vst [vmem:[#allocation3] sm:$0xff] %v1484
        %v1491 = vrot.slane %v1447, 4
        %1493 = vmatprep.subr.bf16.mxu0 0
        %1494 = vmatpush1.bf16.msra.mxu0 %v1172
        %1495 = vmatprep.subr.bf16.mxu0 0
        %1496 = vmatpush1.bf16.msra.mxu0 %v1180
        %1497 = vmatprep.subr.bf16.mxu0 0
        %1498 = vmatpush1.bf16.msra.mxu0 %v1188
        %1499 = vmatprep.subr.bf16.mxu0 0
        %1500 = vmatpush1.bf16.msra.mxu0 %v1196
        %1501 = vmatprep.subr.bf16.mxu0 0
        %1502 = vmatpush1.bf16.msra.mxu0 %v1204
        %1503 = vmatprep.subr.bf16.mxu0 0
        %1504 = vmatpush1.bf16.msra.mxu0 %v1212
        %1505 = vmatprep.subr.bf16.mxu0 0
        %1506 = vmatpush1.bf16.msra.mxu0 %v1220
        %1507 = vmatprep.subr.bf16.mxu0 0
        %1508 = vmatpush1.bf16.msra.mxu0 %v1228
        %1509 = vmatprep.subr.bf16.mxu0 0
        %1510 = vmatpush1.bf16.msra.mxu0 0
        %1511 = vmatprep.subr.bf16.mxu0 0
        %1512 = vmatpush1.bf16.msra.mxu0 0
        %1513 = vmatprep.subr.bf16.mxu0 0
        %1514 = vmatpush1.bf16.msra.mxu0 0
        %1515 = vmatprep.subr.bf16.mxu0 0
        %1516 = vmatpush1.bf16.msra.mxu0 0
        %1517 = vmatprep.subr.bf16.mxu0 0
        %1518 = vmatpush1.bf16.msra.mxu0 0
        %1519 = vmatprep.subr.bf16.mxu0 0
        %1520 = vmatpush1.bf16.msra.mxu0 0
        %1521 = vmatprep.subr.bf16.mxu0 0
        %1522 = vmatpush1.bf16.msra.mxu0 0
        %1523 = vmatprep.subr.bf16.mxu0 0
        %1524 = vmatpush1.bf16.msra.mxu0 0
        %1525 = vmatprep.mubr.bf16.mxu0 0
        %1526 = vmatmul.mubr.bf16.gmra.mrb[0].mxu0 %v1491
        %v1527 = vpop.f32.mrb[0].mxu0
        %v1528 = vadd.f32 0.0, %v1527
        %v1529 = vpop.f32.mrb[0].mxu0
        %v1530 = vpop.f32.mrb[0].mxu0
        %v1531 = vpop.f32.mrb[0].mxu0
        %1532 = vdwg.mxu0
        %1533 = vst [vmem:[#allocation3 + $0x8] sm:$0xff] %v1528
        %1534 = vmatprep.subr.bf16.mxu0 0
        %1535 = vmatpush1.bf16.msra.mxu0 %v1173
        %1536 = vmatprep.subr.bf16.mxu0 0
        %1537 = vmatpush1.bf16.msra.mxu0 %v1181
        %1538 = vmatprep.subr.bf16.mxu0 0
        %1539 = vmatpush1.bf16.msra.mxu0 %v1189
        %1540 = vmatprep.subr.bf16.mxu0 0
        %1541 = vmatpush1.bf16.msra.mxu0 %v1197
        %1542 = vmatprep.subr.bf16.mxu0 0
        %1543 = vmatpush1.bf16.msra.mxu0 %v1205
        %1544 = vmatprep.subr.bf16.mxu0 0
        %1545 = vmatpush1.bf16.msra.mxu0 %v1213
        %1546 = vmatprep.subr.bf16.mxu0 0
        %1547 = vmatpush1.bf16.msra.mxu0 %v1221
        %1548 = vmatprep.subr.bf16.mxu0 0
        %1549 = vmatpush1.bf16.msra.mxu0 %v1229
        %1550 = vmatprep.subr.bf16.mxu0 0
        %1551 = vmatpush1.bf16.msra.mxu0 0
        %1552 = vmatprep.subr.bf16.mxu0 0
        %1553 = vmatpush1.bf16.msra.mxu0 0
        %1554 = vmatprep.subr.bf16.mxu0 0
        %1555 = vmatpush1.bf16.msra.mxu0 0
        %1556 = vmatprep.subr.bf16.mxu0 0
        %1557 = vmatpush1.bf16.msra.mxu0 0
        %1558 = vmatprep.subr.bf16.mxu0 0
        %1559 = vmatpush1.bf16.msra.mxu0 0
        %1560 = vmatprep.subr.bf16.mxu0 0
        %1561 = vmatpush1.bf16.msra.mxu0 0
        %1562 = vmatprep.subr.bf16.mxu0 0
        %1563 = vmatpush1.bf16.msra.mxu0 0
        %1564 = vmatprep.subr.bf16.mxu0 0
        %1565 = vmatpush1.bf16.msra.mxu0 0
        %1566 = vmatprep.mubr.bf16.mxu0 0
        %1567 = vmatmul.mubr.bf16.gmra.mrb[0].mxu0 %v1448
        %v1568 = vpop.f32.mrb[0].mxu0
        %v1569 = vadd.f32 0.0, %v1568
        %v1570 = vpop.f32.mrb[0].mxu0
        %v1571 = vpop.f32.mrb[0].mxu0
        %v1572 = vpop.f32.mrb[0].mxu0
        %1573 = vdwg.mxu0
        %1574 = vst [vmem:[#allocation3 + $0x10] sm:$0xff] %v1569
        %v1576 = vrot.slane %v1448, 4
        %1578 = vmatprep.subr.bf16.mxu0 0
        %1579 = vmatpush1.bf16.msra.mxu0 %v1174
        %1580 = vmatprep.subr.bf16.mxu0 0
        %1581 = vmatpush1.bf16.msra.mxu0 %v1182
        %1582 = vmatprep.subr.bf16.mxu0 0
        %1583 = vmatpush1.bf16.msra.mxu0 %v1190
        %1584 = vmatprep.subr.bf16.mxu0 0
        %1585 = vmatpush1.bf16.msra.mxu0 %v1198
        %1586 = vmatprep.subr.bf16.mxu0 0
        %1587 = vmatpush1.bf16.msra.mxu0 %v1206
        %1588 = vmatprep.subr.bf16.mxu0 0
        %1589 = vmatpush1.bf16.msra.mxu0 %v1214
        %1590 = vmatprep.subr.bf16.mxu0 0
        %1591 = vmatpush1.bf16.msra.mxu0 %v1222
        %1592 = vmatprep.subr.bf16.mxu0 0
        %1593 = vmatpush1.bf16.msra.mxu0 %v1230
        %1594 = vmatprep.subr.bf16.mxu0 0
        %1595 = vmatpush1.bf16.msra.mxu0 0
        %1596 = vmatprep.subr.bf16.mxu0 0
        %1597 = vmatpush1.bf16.msra.mxu0 0
        %1598 = vmatprep.subr.bf16.mxu0 0
        %1599 = vmatpush1.bf16.msra.mxu0 0
        %1600 = vmatprep.subr.bf16.mxu0 0
        %1601 = vmatpush1.bf16.msra.mxu0 0
        %1602 = vmatprep.subr.bf16.mxu0 0
        %1603 = vmatpush1.bf16.msra.mxu0 0
        %1604 = vmatprep.subr.bf16.mxu0 0
        %1605 = vmatpush1.bf16.msra.mxu0 0
        %1606 = vmatprep.subr.bf16.mxu0 0
        %1607 = vmatpush1.bf16.msra.mxu0 0
        %1608 = vmatprep.subr.bf16.mxu0 0
        %1609 = vmatpush1.bf16.msra.mxu0 0
        %1610 = vmatprep.mubr.bf16.mxu0 0
        %1611 = vmatmul.mubr.bf16.gmra.mrb[0].mxu0 %v1576
        %v1612 = vpop.f32.mrb[0].mxu0
        %v1613 = vadd.f32 0.0, %v1612
        %v1614 = vpop.f32.mrb[0].mxu0
        %v1615 = vpop.f32.mrb[0].mxu0
        %v1616 = vpop.f32.mrb[0].mxu0
        %1617 = vdwg.mxu0
        %1618 = vst [vmem:[#allocation3 + $0x18] sm:$0xff] %v1613
        %v1619 = vld [vmem:[#allocation3] sm:$0xff]
        %v1620 = vld [vmem:[#allocation3 + $0x8] sm:$0xff]
        %v1621 = vld [vmem:[#allocation3 + $0x10] sm:$0xff]
        %v1622 = vld [vmem:[#allocation3 + $0x18] sm:$0xff]
        %v1623 = vpack.c.bf16 %v1619, %v1619
        %v1624 = vpack.c.bf16 %v1620, %v1620
        %v1625 = vpack.c.bf16 %v1621, %v1621
        %v1626 = vpack.c.bf16 %v1622, %v1622
        %v1627 = vld [vmem:[%s6] sm:$0xf]
        %v1628 = vld [vmem:[%s6 + $0x4] sm:$0xf]
        %v1629 = vld [vmem:[%s6 + $0x8] sm:$0xf]
        %v1630 = vld [vmem:[%s6 + $0xc] sm:$0xf]
        %v1631 = vld [vmem:[%s6 + $0x10] sm:$0xf]
        %v1632 = vld [vmem:[%s6 + $0x14] sm:$0xf]
        %v1633 = vld [vmem:[%s6 + $0x18] sm:$0xf]
        %v1634 = vld [vmem:[%s6 + $0x1c] sm:$0xf]
        %v1635 = vld [vmem:[%s6 + $0x20] sm:$0xf]
        %v1636 = vld [vmem:[%s6 + $0x24] sm:$0xf]
        %v1637 = vld [vmem:[%s6 + $0x28] sm:$0xf]
        %v1638 = vld [vmem:[%s6 + $0x2c] sm:$0xf]
        %v1639 = vld [vmem:[%s6 + $0x30] sm:$0xf]
        %v1640 = vld [vmem:[%s6 + $0x34] sm:$0xf]
        %v1641 = vld [vmem:[%s6 + $0x38] sm:$0xf]
        %v1642 = vld [vmem:[%s6 + $0x3c] sm:$0xf]
        %v1643 = vld [vmem:[%s6 + $0x40] sm:$0xf]
        %v1644 = vld [vmem:[%s6 + $0x44] sm:$0xf]
        %v1645 = vld [vmem:[%s6 + $0x48] sm:$0xf]
        %v1646 = vld [vmem:[%s6 + $0x4c] sm:$0xf]
        %v1647 = vld [vmem:[%s6 + $0x50] sm:$0xf]
        %v1648 = vld [vmem:[%s6 + $0x54] sm:$0xf]
        %v1649 = vld [vmem:[%s6 + $0x58] sm:$0xf]
        %v1650 = vld [vmem:[%s6 + $0x5c] sm:$0xf]
        %v1651 = vld [vmem:[%s6 + $0x60] sm:$0xf]
        %v1652 = vld [vmem:[%s6 + $0x64] sm:$0xf]
        %v1653 = vld [vmem:[%s6 + $0x68] sm:$0xf]
        %v1654 = vld [vmem:[%s6 + $0x6c] sm:$0xf]
        %v1655 = vld [vmem:[%s6 + $0x70] sm:$0xf]
        %v1656 = vld [vmem:[%s6 + $0x74] sm:$0xf]
        %v1657 = vld [vmem:[%s6 + $0x78] sm:$0xf]
        %v1658 = vld [vmem:[%s6 + $0x7c] sm:$0xf]
        %v1659 = vld [vmem:[%s6 + $0x80] sm:$0xf]
        %v1660 = vld [vmem:[%s6 + $0x84] sm:$0xf]
        %v1661 = vld [vmem:[%s6 + $0x88] sm:$0xf]
        %v1662 = vld [vmem:[%s6 + $0x8c] sm:$0xf]
        %v1663 = vld [vmem:[%s6 + $0x90] sm:$0xf]
        %v1664 = vld [vmem:[%s6 + $0x94] sm:$0xf]
        %v1665 = vld [vmem:[%s6 + $0x98] sm:$0xf]
        %v1666 = vld [vmem:[%s6 + $0x9c] sm:$0xf]
        %v1667 = vld [vmem:[%s6 + $0xa0] sm:$0xf]
        %v1668 = vld [vmem:[%s6 + $0xa4] sm:$0xf]
        %v1669 = vld [vmem:[%s6 + $0xa8] sm:$0xf]
        %v1670 = vld [vmem:[%s6 + $0xac] sm:$0xf]
        %v1671 = vld [vmem:[%s6 + $0xb0] sm:$0xf]
        %v1672 = vld [vmem:[%s6 + $0xb4] sm:$0xf]
        %v1673 = vld [vmem:[%s6 + $0xb8] sm:$0xf]
        %v1674 = vld [vmem:[%s6 + $0xbc] sm:$0xf]
        %v1675 = vld [vmem:[%s6 + $0xc0] sm:$0xf]
        %v1676 = vld [vmem:[%s6 + $0xc4] sm:$0xf]
        %v1677 = vld [vmem:[%s6 + $0xc8] sm:$0xf]
        %v1678 = vld [vmem:[%s6 + $0xcc] sm:$0xf]
        %v1679 = vld [vmem:[%s6 + $0xd0] sm:$0xf]
        %v1680 = vld [vmem:[%s6 + $0xd4] sm:$0xf]
        %v1681 = vld [vmem:[%s6 + $0xd8] sm:$0xf]
        %v1682 = vld [vmem:[%s6 + $0xdc] sm:$0xf]
        %v1683 = vld [vmem:[%s6 + $0xe0] sm:$0xf]
        %v1684 = vld [vmem:[%s6 + $0xe4] sm:$0xf]
        %v1685 = vld [vmem:[%s6 + $0xe8] sm:$0xf]
        %v1686 = vld [vmem:[%s6 + $0xec] sm:$0xf]
        %v1687 = vld [vmem:[%s6 + $0xf0] sm:$0xf]
        %v1688 = vld [vmem:[%s6 + $0xf4] sm:$0xf]
        %v1689 = vld [vmem:[%s6 + $0xf8] sm:$0xf]
        %v1690 = vld [vmem:[%s6 + $0xfc] sm:$0xf]
        %v1691 = vld [vmem:[%s7] sm:$0x1]
        %v1693 = vlaneseq
        %v1694 = vshrl.u32 %v1693, 7
        %v1695 = vsub.s32 0, %v1694
        %v1696 = vrot.slane %v1691, %v1695
        %v1762 = vunpack.c.l.b16 %v1627
        %v1763 = vunpack.c.l.b16 %v1628
        %v1764 = vunpack.c.l.b16 %v1629
        %v1765 = vunpack.c.l.b16 %v1630
        %v1766 = vunpack.c.l.b16 %v1631
        %v1767 = vunpack.c.l.b16 %v1632
        %v1768 = vunpack.c.l.b16 %v1633
        %v1769 = vunpack.c.l.b16 %v1634
        %v1770 = vunpack.c.l.b16 %v1635
        %v1771 = vunpack.c.l.b16 %v1636
        %v1772 = vunpack.c.l.b16 %v1637
        %v1773 = vunpack.c.l.b16 %v1638
        %v1774 = vunpack.c.l.b16 %v1639
        %v1775 = vunpack.c.l.b16 %v1640
        %v1776 = vunpack.c.l.b16 %v1641
        %v1777 = vunpack.c.l.b16 %v1642
        %v1778 = vunpack.c.l.b16 %v1643
        %v1779 = vunpack.c.l.b16 %v1644
        %v1780 = vunpack.c.l.b16 %v1645
        %v1781 = vunpack.c.l.b16 %v1646
        %v1782 = vunpack.c.l.b16 %v1647
        %v1783 = vunpack.c.l.b16 %v1648
        %v1784 = vunpack.c.l.b16 %v1649
        %v1785 = vunpack.c.l.b16 %v1650
        %v1786 = vunpack.c.l.b16 %v1651
        %v1787 = vunpack.c.l.b16 %v1652
        %v1788 = vunpack.c.l.b16 %v1653
        %v1789 = vunpack.c.l.b16 %v1654
        %v1790 = vunpack.c.l.b16 %v1655
        %v1791 = vunpack.c.l.b16 %v1656
        %v1792 = vunpack.c.l.b16 %v1657
        %v1793 = vunpack.c.l.b16 %v1658
        %v1794 = vunpack.c.l.b16 %v1659
        %v1795 = vunpack.c.l.b16 %v1660
        %v1796 = vunpack.c.l.b16 %v1661
        %v1797 = vunpack.c.l.b16 %v1662
        %v1798 = vunpack.c.l.b16 %v1663
        %v1799 = vunpack.c.l.b16 %v1664
        %v1800 = vunpack.c.l.b16 %v1665
        %v1801 = vunpack.c.l.b16 %v1666
        %v1802 = vunpack.c.l.b16 %v1667
        %v1803 = vunpack.c.l.b16 %v1668
        %v1804 = vunpack.c.l.b16 %v1669
        %v1805 = vunpack.c.l.b16 %v1670
        %v1806 = vunpack.c.l.b16 %v1671
        %v1807 = vunpack.c.l.b16 %v1672
        %v1808 = vunpack.c.l.b16 %v1673
        %v1809 = vunpack.c.l.b16 %v1674
        %v1810 = vunpack.c.l.b16 %v1675
        %v1811 = vunpack.c.l.b16 %v1676
        %v1812 = vunpack.c.l.b16 %v1677
        %v1813 = vunpack.c.l.b16 %v1678
        %v1814 = vunpack.c.l.b16 %v1679
        %v1815 = vunpack.c.l.b16 %v1680
        %v1816 = vunpack.c.l.b16 %v1681
        %v1817 = vunpack.c.l.b16 %v1682
        %v1818 = vunpack.c.l.b16 %v1683
        %v1819 = vunpack.c.l.b16 %v1684
        %v1820 = vunpack.c.l.b16 %v1685
        %v1821 = vunpack.c.l.b16 %v1686
        %v1822 = vunpack.c.l.b16 %v1687
        %v1823 = vunpack.c.l.b16 %v1688
        %v1824 = vunpack.c.l.b16 %v1689
        %v1825 = vunpack.c.l.b16 %v1690
        %v1826 = vpack.c.b16 %v1763, %v1762
        %v1827 = vpack.c.b16 %v1765, %v1764
        %v1828 = vpack.c.b16 %v1767, %v1766
        %v1829 = vpack.c.b16 %v1769, %v1768
        %v1830 = vpack.c.b16 %v1771, %v1770
        %v1831 = vpack.c.b16 %v1773, %v1772
        %v1832 = vpack.c.b16 %v1775, %v1774
        %v1833 = vpack.c.b16 %v1777, %v1776
        %v1834 = vpack.c.b16 %v1779, %v1778
        %v1835 = vpack.c.b16 %v1781, %v1780
        %v1836 = vpack.c.b16 %v1783, %v1782
        %v1837 = vpack.c.b16 %v1785, %v1784
        %v1838 = vpack.c.b16 %v1787, %v1786
        %v1839 = vpack.c.b16 %v1789, %v1788
        %v1840 = vpack.c.b16 %v1791, %v1790
        %v1841 = vpack.c.b16 %v1793, %v1792
        %v1842 = vpack.c.b16 %v1795, %v1794
        %v1843 = vpack.c.b16 %v1797, %v1796
        %v1844 = vpack.c.b16 %v1799, %v1798
        %v1845 = vpack.c.b16 %v1801, %v1800
        %v1846 = vpack.c.b16 %v1803, %v1802
        %v1847 = vpack.c.b16 %v1805, %v1804
        %v1848 = vpack.c.b16 %v1807, %v1806
        %v1849 = vpack.c.b16 %v1809, %v1808
        %v1850 = vpack.c.b16 %v1811, %v1810
        %v1851 = vpack.c.b16 %v1813, %v1812
        %v1852 = vpack.c.b16 %v1815, %v1814
        %v1853 = vpack.c.b16 %v1817, %v1816
        %v1854 = vpack.c.b16 %v1819, %v1818
        %v1855 = vpack.c.b16 %v1821, %v1820
        %v1856 = vpack.c.b16 %v1823, %v1822
        %v1857 = vpack.c.b16 %v1825, %v1824
        %1890 = vmatprep.subr.bf16.mxu0 0
        %1891 = vmatpush1.bf16.msra.mxu0 %v1826
        %1892 = vmatprep.subr.bf16.mxu0 0
        %1893 = vmatpush1.bf16.msra.mxu0 %v1827
        %1894 = vmatprep.subr.bf16.mxu0 0
        %1895 = vmatpush1.bf16.msra.mxu0 %v1828
        %1896 = vmatprep.subr.bf16.mxu0 0
        %1897 = vmatpush1.bf16.msra.mxu0 %v1829
        %1898 = vmatprep.subr.bf16.mxu0 0
        %1899 = vmatpush1.bf16.msra.mxu0 %v1830
        %1900 = vmatprep.subr.bf16.mxu0 0
        %1901 = vmatpush1.bf16.msra.mxu0 %v1831
        %1902 = vmatprep.subr.bf16.mxu0 0
        %1903 = vmatpush1.bf16.msra.mxu0 %v1832
        %1904 = vmatprep.subr.bf16.mxu0 0
        %1905 = vmatpush1.bf16.msra.mxu0 %v1833
        %1906 = vmatprep.subr.bf16.mxu0 0
        %1907 = vmatpush1.bf16.msra.mxu0 %v1834
        %1908 = vmatprep.subr.bf16.mxu0 0
        %1909 = vmatpush1.bf16.msra.mxu0 %v1835
        %1910 = vmatprep.subr.bf16.mxu0 0
        %1911 = vmatpush1.bf16.msra.mxu0 %v1836
        %1912 = vmatprep.subr.bf16.mxu0 0
        %1913 = vmatpush1.bf16.msra.mxu0 %v1837
        %1914 = vmatprep.subr.bf16.mxu0 0
        %1915 = vmatpush1.bf16.msra.mxu0 %v1838
        %1916 = vmatprep.subr.bf16.mxu0 0
        %1917 = vmatpush1.bf16.msra.mxu0 %v1839
        %1918 = vmatprep.subr.bf16.mxu0 0
        %1919 = vmatpush1.bf16.msra.mxu0 %v1840
        %1920 = vmatprep.subr.bf16.mxu0 0
        %1921 = vmatpush1.bf16.msra.mxu0 %v1841
        %1922 = vmatprep.mubr.bf16.mxu0 %v1624
        %1923 = vmatmul.mubr.bf16.gmra.mrb[0].mxu0 %v1623
        %v1924 = vpop.f32.mrb[0].mxu0
        %v1925 = vadd.f32 %v1696, %v1924
        %v1926 = vpop.f32.mrb[0].mxu0
        %v1927 = vpop.f32.mrb[0].mxu0
        %v1928 = vpop.f32.mrb[0].mxu0
        %1929 = vdwg.mxu0
        %1930 = vmatprep.subr.bf16.mxu0 0
        %1931 = vmatpush1.bf16.msra.mxu0 %v1842
        %1932 = vmatprep.subr.bf16.mxu0 0
        %1933 = vmatpush1.bf16.msra.mxu0 %v1843
        %1934 = vmatprep.subr.bf16.mxu0 0
        %1935 = vmatpush1.bf16.msra.mxu0 %v1844
        %1936 = vmatprep.subr.bf16.mxu0 0
        %1937 = vmatpush1.bf16.msra.mxu0 %v1845
        %1938 = vmatprep.subr.bf16.mxu0 0
        %1939 = vmatpush1.bf16.msra.mxu0 %v1846
        %1940 = vmatprep.subr.bf16.mxu0 0
        %1941 = vmatpush1.bf16.msra.mxu0 %v1847
        %1942 = vmatprep.subr.bf16.mxu0 0
        %1943 = vmatpush1.bf16.msra.mxu0 %v1848
        %1944 = vmatprep.subr.bf16.mxu0 0
        %1945 = vmatpush1.bf16.msra.mxu0 %v1849
        %1946 = vmatprep.subr.bf16.mxu0 0
        %1947 = vmatpush1.bf16.msra.mxu0 %v1850
        %1948 = vmatprep.subr.bf16.mxu0 0
        %1949 = vmatpush1.bf16.msra.mxu0 %v1851
        %1950 = vmatprep.subr.bf16.mxu0 0
        %1951 = vmatpush1.bf16.msra.mxu0 %v1852
        %1952 = vmatprep.subr.bf16.mxu0 0
        %1953 = vmatpush1.bf16.msra.mxu0 %v1853
        %1954 = vmatprep.subr.bf16.mxu0 0
        %1955 = vmatpush1.bf16.msra.mxu0 %v1854
        %1956 = vmatprep.subr.bf16.mxu0 0
        %1957 = vmatpush1.bf16.msra.mxu0 %v1855
        %1958 = vmatprep.subr.bf16.mxu0 0
        %1959 = vmatpush1.bf16.msra.mxu0 %v1856
        %1960 = vmatprep.subr.bf16.mxu0 0
        %1961 = vmatpush1.bf16.msra.mxu0 %v1857
        %1962 = vmatprep.mubr.bf16.mxu0 %v1626
        %1963 = vmatmul.mubr.bf16.gmra.mrb[0].mxu0 %v1625
        %v1964 = vpop.f32.mrb[0].mxu0
        %v1965 = vadd.f32 %v1925, %v1964
        %v1966 = vpop.f32.mrb[0].mxu0
        %v1967 = vpop.f32.mrb[0].mxu0
        %v1968 = vpop.f32.mrb[0].mxu0
        %1969 = vdwg.mxu0
        %vm1970 = vcmask 261120
        %1971 = vst.msk [vmem:[%s298] sm:$0xff] %vm1970, %v1965
        %s1972 = sand.u32 %s203, 1
        %s1973 = scalar_lea.sflag [#allocation5], %s1972
        %s1974 = sand.u32 %s203, 1
        %s1975 = smul.addr %s1974, 8
        %s1976 = scalar_lea.vmem [#allocation4], %s1975
        // Predicated region
        $region53: #{attentional_pooler.1} parent=51 // pred_check
          %p1977 = pneg %p213
        $region54: #{attentional_pooler.1} parent=51 // pred_check_branch
          %1979 = sbr.rel (%p1977) target = $region56
        $region55: #{attentional_pooler.1} parent=51 // pred_region
          %s1981 = ssub.s32 128, 128
          %1982 = vsyncadd %s1973, %s1981
          %s1983 = smul.addr %s22, 128
          %s1984 = scalar_lea.hbm %s8, %s1983
          %s1986 = sshll.u32 %s1976, 4
          %s1987 = int_to_ptr.vmem [resolvable:$true] %s1986
          %1989 = dma.vmem_to_hbm [thread:$0]  %s1987, 128, %s1984, %s1973
        $region56: #{attentional_pooler.1} parent=51 // pred_fallthru
          _
      $region52: #{attentional_pooler.1} parent=5 // pred_fallthru
        _
      %p1990 = scmp.le.s32.totalorder 2, %s17
      // Predicated region
      $region57: #{attentional_pooler.1} parent=5 // pred_check
        %p1991 = pneg %p1990
      $region58: #{attentional_pooler.1} parent=5 // pred_check_branch
        %1993 = sbr.rel (%p1991) target = $region60
      $region59: #{attentional_pooler.1} parent=5 // pred_region
        %s1994 = ssub.s32 %s17, 2
        // Predicated region
        $region61: #{attentional_pooler.1} parent=59 // pred_check
          %p1995 = pneg %p219
        $region62: #{attentional_pooler.1} parent=59 // pred_check_branch
          %1997 = sbr.rel (%p1995) target = $region64
        $region63: #{attentional_pooler.1} parent=59 // pred_region
          %s1998 = sand.u32 %s204, 1
          %s1999 = scalar_lea.sflag [#allocation5], %s1998
          %s2000 = sand.u32 %s204, 1
          %s2001 = smul.addr %s2000, 8
          %s2002 = scalar_lea.vmem [#allocation4], %s2001
          %2003 = dma.done %s1999, 128
        $region64: #{attentional_pooler.1} parent=59 // pred_fallthru
          _
      $region60: #{attentional_pooler.1} parent=5 // pred_fallthru
        _
    $region6: #{attentional_pooler.1} parent=1 // loop_footer
      %s21 = sadd.s32 1, %s17
    $region7: #{attentional_pooler.1} parent=1 // loop_footer_branch
      %16 = sbr.rel target = $region3
    $region8: #{attentional_pooler.1} parent=1 // loop_exit
      _
    %2004 = vsyncpa [#allocation5], 1
    %s2005 = scalar_lea.sflag [#allocation5], 1
    %2006 = vsyncpa %s2005, 1

</llo_original>
